<compile_context>
chip_gen: v7x
topology: tpu7x:2x2x1
jax: 0.10.0
libtpu: 0.0.40
codegen_flags: <defaults>
</compile_context>

<pallas_src>
import functools

import jax
import jax.numpy as jnp
from jax.experimental import pallas as pl
from jax.experimental.pallas import tpu as pltpu

HIDDEN = 768      # self.out4 = nn.Linear(768, 20)
OUT = 20
OUT_PAD = 128     # lane-dense padded output width (multiple of 128)
ROW_TILE_CAP = 1024


def _round_up(n, m):
    return ((n + m - 1) // m) * m


def _choose_row_tile(batch):
    """Sublane-aligned batch tile: large (HBM-bound kernel) but <= half the batch so the
    'parallel' grid axis has >=2 steps and both v7x TensorCores get work."""
    b8 = max(8, _round_up(batch, 8))
    two_step = _round_up(pl.cdiv(b8, 2), 8)
    return max(8, min(ROW_TILE_CAP, two_step))


def _fc_relu_softmax_kernel(x_ref, w_ref, b_ref, y_ref):
    """Fused Linear(768->OUT_PAD) + ReLU + masked Softmax over the first OUT lanes.

    x_ref: (TB, 768)        activation tile (trailing tile may contain OOB garbage rows;
                            they are row-independent and masked on store by Pallas)
    w_ref: (768, OUT_PAD)   weight, zero-padded beyond column OUT (torch Linear.weight.T)
    b_ref: (1, OUT_PAD)     bias, zero-padded beyond column OUT
    y_ref: (TB, OUT_PAD)    output probabilities (valid in [:, :OUT])
    """
    x = x_ref[...]

    # Linear: x @ W + b.  Full-precision MXU passes are free here (memory-bound kernel).
    logits = jnp.dot(
        x, w_ref[...],
        preferred_element_type=jnp.float32,
        precision=jax.lax.Precision.HIGHEST,
    ) + b_ref[...]

    # ReLU (VPU).
    r = jnp.maximum(logits, jnp.float32(0.0))

    # Mask padded lanes to -inf AFTER the ReLU so they contribute exp(-inf)=0 to the
    # softmax denominator.
    lane = jax.lax.broadcasted_iota(jnp.int32, r.shape, dimension=1)
    r = jnp.where(lane < OUT, r, -jnp.inf)

    # Numerically stable softmax over the last axis (exact divide: rows sum to 1.0).
    m = jnp.max(r, axis=-1, keepdims=True)
    e = jnp.exp(r - m)                        # EUP exp; padded lanes -> 0
    denom = jnp.sum(e, axis=-1, keepdims=True)
    y_ref[...] = (e / denom).astype(y_ref.dtype)


@functools.partial(jax.jit, static_argnames=("row_tile",))
def _fc_relu_softmax(x, w_pad, b_pad, *, row_tile):
    """Fused kernel over a batch-gridded (B, 768) activation matrix (no pre-padding)."""
    batch = x.shape[0]
    grid = (pl.cdiv(batch, row_tile),)

    flops = 2 * batch * HIDDEN * OUT_PAD
    bytes_accessed = (
        batch * HIDDEN * x.dtype.itemsize   # x (dominant term)
        + HIDDEN * OUT_PAD * 4              # w (resident)
        + OUT_PAD * 4                       # b (resident)
        + batch * OUT_PAD * 4               # y
    )

    return pl.pallas_call(
        _fc_relu_softmax_kernel,
        out_shape=jax.ShapeDtypeStruct((batch, OUT_PAD), jnp.float32),
        grid=grid,
        in_specs=[
            pl.BlockSpec((row_tile, HIDDEN), lambda i: (i, 0)),   # streamed per tile
            pl.BlockSpec((HIDDEN, OUT_PAD), lambda i: (0, 0)),    # resident weight
            pl.BlockSpec((1, OUT_PAD), lambda i: (0, 0)),         # resident bias
        ],
        out_specs=pl.BlockSpec((row_tile, OUT_PAD), lambda i: (i, 0)),
        compiler_params=pltpu.CompilerParams(
            dimension_semantics=("parallel",),   # shard batch tiles across TCs (v7x)
        ),
        cost_estimate=pl.CostEstimate(
            flops=flops,
            transcendentals=batch * OUT_PAD,
            bytes_accessed=bytes_accessed,
        ),
    )(x, w_pad, b_pad)


def prepare_out4_params(w4, b4, dtype=jnp.float32):
    """Pad out4 parameters to the lane-dense OUT_PAD width.  Call once at init time so
    the pad/scatter ops are not re-run on every forward.

    w4: (768, 20)  (== torch out4.weight.T),  b4: (20,)  (== torch out4.bias)
    """
    w4 = jnp.asarray(w4, dtype)
    b4 = jnp.asarray(b4, jnp.float32)
    w_pad = jnp.zeros((HIDDEN, OUT_PAD), dtype).at[:, :OUT].set(w4)
    b_pad = jnp.zeros((1, OUT_PAD), jnp.float32).at[0, :OUT].set(b4)
    return w_pad, b_pad


def model_net_forward(text_word_embedding, w4, b4):
    """JAX/Pallas equivalent of Model_Net.forward.

    text_word_embedding: (B, S, D) with S*D == 768
    w4/b4: either raw Linear params ((768,20)/(20,)) or the pre-padded outputs of
           prepare_out4_params (preferred: hoists the padding out of the hot path).
    Returns (ypre, text_att) with ypre (B, 20), text_att (B, 768).

    NOTE: for best HBM bandwidth (esp. v5e) the producer (BERT) should emit bf16
    activations directly; a wrapper-side astype would just add a full read+write pass.
    """
    B, S, D = text_word_embedding.shape
    assert S * D == HIDDEN, "reshape target must be (-1, 768) for out4 Linear(768, 20)"

    # Glue: reshape to (B, 768) — equivalent to torch.reshape(..., (-1, S*D)).
    text_att = text_word_embedding.reshape(B, HIDDEN)

    if w4.ndim == 2 and w4.shape == (HIDDEN, OUT_PAD):
        w_pad, b_pad = w4, b4.reshape(1, OUT_PAD)
    else:
        w_pad, b_pad = prepare_out4_params(w4, b4)

    row_tile = _choose_row_tile(B)
    y_pad = _fc_relu_softmax(text_att, w_pad, b_pad, row_tile=row_tile)
    ypre = y_pad[:, :OUT]

    return ypre, text_att


def _init_linear_params(key, fan_in, fan_out):
    """Deterministic init matching torch.nn.Linear's U(-1/sqrt(fan_in), 1/sqrt(fan_in))."""
    kw, kb = jax.random.split(key)
    bound = 1.0 / jnp.sqrt(jnp.float32(fan_in))
    w = jax.random.uniform(kw, (fan_in, fan_out), jnp.float32, -bound, bound)
    b = jax.random.uniform(kb, (fan_out,), jnp.float32, -bound, bound)
    return w, b


if __name__ == "__main__":
    key = jax.random.PRNGKey(0)
    k_emb1, k_emb2, k_lin = jax.random.split(key, 3)

    # Parameters of self.out4 = nn.Linear(768, 20); pad once (hoisted out of forward).
    w4, b4 = _init_linear_params(k_lin, HIDDEN, OUT)
    w_pad, b_pad = prepare_out4_params(w4, b4)

    def run_and_check(emb):
        B = emb.shape[0]
        ypre, text_att = model_net_forward(emb, w_pad, b_pad)
        jax.block_until_ready((ypre, text_att))

        ref_logits = jnp.dot(emb.reshape(B, HIDDEN), w4,
                             precision=jax.lax.Precision.HIGHEST) + b4
        ref = jax.nn.softmax(jnp.maximum(ref_logits, 0.0), axis=-1)
        assert ypre.shape == (B, OUT)
        assert text_att.shape == (B, HIDDEN)
        assert jnp.allclose(ypre, ref, atol=1e-3, rtol=1e-3)
        assert jnp.allclose(jnp.sum(ypre, axis=-1), 1.0, atol=1e-3)

    # Synthetic "BERT text embeddings" (S*D == 768 so reshape feeds Linear(768, 20)).
    # (B=2, S=1, D=768): single partial tile;  (B=10, S=4, D=192): multi-tile + partial tail.
    run_and_check(jax.random.normal(k_emb1, (2, 1, HIDDEN), jnp.float32))
    run_and_check(jax.random.normal(k_emb2, (10, 4, 192), jnp.float32))

    print("KERNEL_OK")
</pallas_src>

<mosaic_0001>
module attributes {stable_mosaic.version = 11 : i64} {
  func.func @_fc_relu_softmax_kernel(%arg0: i32, %arg1: memref<8x768xf32, #tpu.memory_space<vmem>>, %arg2: memref<768x128xf32, #tpu.memory_space<vmem>>, %arg3: memref<1x128xf32, #tpu.memory_space<vmem>>, %arg4: memref<8x128xf32, #tpu.memory_space<vmem>>) attributes {dimension_semantics = [#tpu.dimension_semantics<parallel>], iteration_bounds = array<i64: 1>, scalar_prefetch = 0 : i64, scratch_operands = 0 : i64, tpu.core_type = #tpu.core_type<tc>, window_params = [{transform_indices = @transform_0, window_bounds = array<i64: 8, 768>}, {pipeline_mode = #tpu.pipeline_mode<synchronous>, transform_indices = @transform_1, window_bounds = array<i64: 768, 128>}, {pipeline_mode = #tpu.pipeline_mode<synchronous>, transform_indices = @transform_2, window_bounds = array<i64: 1, 128>}, {transform_indices = @transform_3, window_bounds = array<i64: 8, 128>}]} {
    %c0 = arith.constant 0 : index
    %c0_0 = arith.constant 0 : index
    %0 = vector.load %arg1[%c0, %c0_0] : memref<8x768xf32, #tpu.memory_space<vmem>>, vector<8x768xf32>
    %c0_1 = arith.constant 0 : index
    %c0_2 = arith.constant 0 : index
    %1 = vector.load %arg2[%c0_1, %c0_2] : memref<768x128xf32, #tpu.memory_space<vmem>>, vector<768x128xf32>
    %cst = arith.constant dense<0.000000e+00> : vector<8x128xf32>
    %2 = tpu.matmul %0, %1, %cst {dimension_numbers = #tpu.dot_dimension_numbers<[1], [0], [0], [1], [0, 0, 1, 1], [], []>, precision = #tpu.contract_precision<fp32>} : vector<8x768xf32>, vector<768x128xf32>, vector<8x128xf32> -> vector<8x128xf32>
    %c0_3 = arith.constant 0 : index
    %c0_4 = arith.constant 0 : index
    %3 = vector.load %arg3[%c0_3, %c0_4] : memref<1x128xf32, #tpu.memory_space<vmem>>, vector<1x128xf32>
    %4 = vector.broadcast %3 : vector<1x128xf32> to vector<8x128xf32>
    %5 = arith.addf %2, %4 : vector<8x128xf32>
    %cst_5 = arith.constant 0.000000e+00 : f32
    %6 = vector.broadcast %cst_5 : f32 to vector<8x128xf32>
    %7 = arith.maximumf %5, %6 : vector<8x128xf32>
    %8 = tpu.iota {dimensions = array<i32: 1>} : vector<8x128xi32>
    %c20_i32 = arith.constant 20 : i32
    %9 = vector.broadcast %c20_i32 : i32 to vector<8x128xi32>
    %10 = arith.cmpi slt, %8, %9 : vector<8x128xi32>
    %cst_6 = arith.constant 0xFF800000 : f32
    %11 = vector.broadcast %cst_6 : f32 to vector<8x128xf32>
    %12 = arith.select %10, %7, %11 : vector<8x128xi1>, vector<8x128xf32>
    %cst_7 = arith.constant dense<0xFF800000> : vector<8xf32>
    %13 = vector.multi_reduction <maximumf>, %12, %cst_7 [1] : vector<8x128xf32> to vector<8xf32>
    %14 = vector.shape_cast %13 : vector<8xf32> to vector<8x1xf32>
    %15 = vector.broadcast %14 : vector<8x1xf32> to vector<8x128xf32>
    %16 = arith.subf %12, %15 : vector<8x128xf32>
    %17 = math.exp %16 : vector<8x128xf32>
    %cst_8 = arith.constant dense<0.000000e+00> : vector<8xf32>
    %18 = vector.multi_reduction <add>, %17, %cst_8 [1] : vector<8x128xf32> to vector<8xf32>
    %19 = vector.shape_cast %18 : vector<8xf32> to vector<8x1xf32>
    %20 = vector.broadcast %19 : vector<8x1xf32> to vector<8x128xf32>
    %21 = arith.divf %17, %20 : vector<8x128xf32>
    %c0_9 = arith.constant 0 : index
    %c0_10 = arith.constant 0 : index
    %22 = vector.load %arg4[%c0_9, %c0_10] : memref<8x128xf32, #tpu.memory_space<vmem>>, vector<8x128xf32>
    tpu.vector_store %arg4[%c0_9, %c0_10], %21 {strides = array<i32>} : memref<8x128xf32, #tpu.memory_space<vmem>>, vector<8x128xf32>,
    return
  }
  func.func @transform_0(%arg0: i32) -> (i32, i32) {
    %c0_i32 = arith.constant 0 : i32
    %c0_i32_0 = arith.constant 0 : i32
    return %arg0, %c0_i32 : i32, i32
  }
  func.func @transform_1(%arg0: i32) -> (i32, i32) {
    %c0_i32 = arith.constant 0 : i32
    %c0_i32_0 = arith.constant 0 : i32
    %c0_i32_1 = arith.constant 0 : i32
    return %c0_i32, %c0_i32_0 : i32, i32
  }
  func.func @transform_2(%arg0: i32) -> (i32, i32) {
    %c0_i32 = arith.constant 0 : i32
    %c0_i32_0 = arith.constant 0 : i32
    %c0_i32_1 = arith.constant 0 : i32
    return %c0_i32, %c0_i32_0 : i32, i32
  }
  func.func @transform_3(%arg0: i32) -> (i32, i32) {
    %c0_i32 = arith.constant 0 : i32
    %c0_i32_0 = arith.constant 0 : i32
    return %arg0, %c0_i32 : i32, i32
  }
}

</mosaic_0001>

<llo_original>
// kernel: _fc_relu_softmax.1
$region0: #{_fc_relu_softmax.1}
  #allocation0 [shape = 'u32[]', space=smem, size = 0x4, offset = 0x4, fixed_abs, tag = 'smem constant byte address 0x4 - core index']
  #allocation1 [shape = 'u32[144,128]{1,0:T(1,128)}', space=vmem, size = 0x12000, scoped, tag = 'internal scratch']
  %s0 = inlined_call_operand.hbm [shape: f32[2,768], index: 0, kind: input, shape index: {}]
  %s1 = inlined_call_operand.hbm [shape: f32[768,128], index: 1, kind: input, shape index: {}]
  %s2 = inlined_call_operand.vmem [shape: f32[1,128], index: 2, kind: input, shape index: {}]
  %s3 = inlined_call_operand.hbm [shape: f32[2,128], index: 3, kind: output, shape index: {}]
  %s4 = sld [smem:[#allocation0]]
  $region30: #{_fc_relu_softmax.1} parent=0
    _
  %s6 = ssub.s32 1, %s4
  %s7 = scalar_select 0, %s6, %s4
  $region1: #{_fc_relu_softmax.1} parent=0
    #allocation2 [shape = 'u8[24576]{0}', space=vmem, size = 0x6000, scoped, tag = 'input window, operand 0, single buffered']
    #allocation3 [shape = 's32[1]{0}', space=sflag, size = 0x4, scoped, tag = 'scoped memory for _fc_relu_softmax.1']
    #allocation4 [shape = 's32[1]{0}', space=sflag, size = 0x4, scoped, tag = 'scoped memory for _fc_relu_softmax.1']
    #allocation5 [shape = 'u8[393216]{0}', space=vmem, size = 0x60000, scoped, tag = 'input window, operand 1, single buffered']
    #allocation6 [shape = 's32[1]{0}', space=sflag, size = 0x4, scoped, tag = 'scoped memory for _fc_relu_softmax.1']
    #allocation7 [shape = 'u8[4096]{0}', space=vmem, size = 0x1000, scoped, tag = 'output window, operand 0, single buffered']
    %8 = vsyncpa [#allocation3], 0
    %9 = vsyncpa [#allocation6], 0
    %10 = vsyncpa [#allocation4], 0
    // Predicated region
    $region2: #{_fc_relu_softmax.1} parent=1 // pred_check
      _
    $region3: #{_fc_relu_softmax.1} parent=1 // pred_check_branch
      %12 = sbr.rel (0) target = $region5
    $region4: #{_fc_relu_softmax.1} parent=1 // pred_region
      %s14 = ssub.s32 768, 192
      %15 = vsyncadd [#allocation3], %s14
      %s16 = sshll.u32 [#allocation2], 4
      %s17 = int_to_ptr.vmem [resolvable:$true] %s16
      %22 = dma.hbm_to_vmem [thread:$0]  %s0, 192, %s17, [#allocation3], 192, 192, 12
    $region5: #{_fc_relu_softmax.1} parent=1 // pred_fallthru
      _
    // Predicated region
    $region6: #{_fc_relu_softmax.1} parent=1 // pred_check
      _
    $region7: #{_fc_relu_softmax.1} parent=1 // pred_check_branch
      %24 = sbr.rel (0) target = $region9
    $region8: #{_fc_relu_softmax.1} parent=1 // pred_region
      %s26 = ssub.s32 12288, 12288
      %27 = vsyncadd [#allocation6], %s26
      %s28 = sshll.u32 [#allocation5], 4
      %s29 = int_to_ptr.vmem [resolvable:$true] %s28
      %34 = dma.hbm_to_vmem [thread:$0]  %s1, 12288, %s29, [#allocation6], 128, 128, 8
    $region9: #{_fc_relu_softmax.1} parent=1 // pred_fallthru
      _
    // Predicated region
    $region10: #{_fc_relu_softmax.1} parent=1 // pred_check
      _
    $region11: #{_fc_relu_softmax.1} parent=1 // pred_check_branch
      %36 = sbr.rel (0) target = $region13
    $region12: #{_fc_relu_softmax.1} parent=1 // pred_region
      _
    $region13: #{_fc_relu_softmax.1} parent=1 // pred_fallthru
      _
    // Predicated region
    $region14: #{_fc_relu_softmax.1} parent=1 // pred_check
      _
    $region15: #{_fc_relu_softmax.1} parent=1 // pred_check_branch
      %38 = sbr.rel (0) target = $region17
    $region16: #{_fc_relu_softmax.1} parent=1 // pred_region
      %39 = dma.done [#allocation3], 768
    $region17: #{_fc_relu_softmax.1} parent=1 // pred_fallthru
      _
    // Predicated region
    $region18: #{_fc_relu_softmax.1} parent=1 // pred_check
      _
    $region19: #{_fc_relu_softmax.1} parent=1 // pred_check_branch
      %41 = sbr.rel (0) target = $region21
    $region20: #{_fc_relu_softmax.1} parent=1 // pred_region
      %42 = dma.done [#allocation6], 12288
    $region21: #{_fc_relu_softmax.1} parent=1 // pred_fallthru
      _
    %v43 = vld [vmem:[#allocation2] sm:$0xff]
    %v44 = vld [vmem:[#allocation2 + $0x8] sm:$0xf]
    %v45 = vld [vmem:[#allocation2 + $0xc] sm:$0xff]
    %v46 = vld [vmem:[#allocation2 + $0x14] sm:$0xf]
    %v47 = vld [vmem:[#allocation2 + $0x18] sm:$0xff]
    %v48 = vld [vmem:[#allocation2 + $0x20] sm:$0xf]
    %v49 = vld [vmem:[#allocation2 + $0x24] sm:$0xff]
    %v50 = vld [vmem:[#allocation2 + $0x2c] sm:$0xf]
    %v51 = vld [vmem:[#allocation5] sm:$0xff]
    %v52 = vld [vmem:[#allocation5 + $0x8] sm:$0xff]
    %v53 = vld [vmem:[#allocation5 + $0x10] sm:$0xff]
    %v54 = vld [vmem:[#allocation5 + $0x18] sm:$0xff]
    %v55 = vld [vmem:[#allocation5 + $0x20] sm:$0xff]
    %v56 = vld [vmem:[#allocation5 + $0x28] sm:$0xff]
    %v57 = vld [vmem:[#allocation5 + $0x30] sm:$0xff]
    %v58 = vld [vmem:[#allocation5 + $0x38] sm:$0xff]
    %v59 = vld [vmem:[#allocation5 + $0x40] sm:$0xff]
    %v60 = vld [vmem:[#allocation5 + $0x48] sm:$0xff]
    %v61 = vld [vmem:[#allocation5 + $0x50] sm:$0xff]
    %v62 = vld [vmem:[#allocation5 + $0x58] sm:$0xff]
    %v63 = vld [vmem:[#allocation5 + $0x60] sm:$0xff]
    %v64 = vld [vmem:[#allocation5 + $0x68] sm:$0xff]
    %v65 = vld [vmem:[#allocation5 + $0x70] sm:$0xff]
    %v66 = vld [vmem:[#allocation5 + $0x78] sm:$0xff]
    %v67 = vld [vmem:[#allocation5 + $0x80] sm:$0xff]
    %v68 = vld [vmem:[#allocation5 + $0x88] sm:$0xff]
    %v69 = vld [vmem:[#allocation5 + $0x90] sm:$0xff]
    %v70 = vld [vmem:[#allocation5 + $0x98] sm:$0xff]
    %v71 = vld [vmem:[#allocation5 + $0xa0] sm:$0xff]
    %v72 = vld [vmem:[#allocation5 + $0xa8] sm:$0xff]
    %v73 = vld [vmem:[#allocation5 + $0xb0] sm:$0xff]
    %v74 = vld [vmem:[#allocation5 + $0xb8] sm:$0xff]
    %v75 = vld [vmem:[#allocation5 + $0xc0] sm:$0xff]
    %v76 = vld [vmem:[#allocation5 + $0xc8] sm:$0xff]
    %v77 = vld [vmem:[#allocation5 + $0xd0] sm:$0xff]
    %v78 = vld [vmem:[#allocation5 + $0xd8] sm:$0xff]
    %v79 = vld [vmem:[#allocation5 + $0xe0] sm:$0xff]
    %v80 = vld [vmem:[#allocation5 + $0xe8] sm:$0xff]
    %v81 = vld [vmem:[#allocation5 + $0xf0] sm:$0xff]
    %v82 = vld [vmem:[#allocation5 + $0xf8] sm:$0xff]
    %v83 = vld [vmem:[#allocation5 + $0x100] sm:$0xff]
    %v84 = vld [vmem:[#allocation5 + $0x108] sm:$0xff]
    %v85 = vld [vmem:[#allocation5 + $0x110] sm:$0xff]
    %v86 = vld [vmem:[#allocation5 + $0x118] sm:$0xff]
    %v87 = vld [vmem:[#allocation5 + $0x120] sm:$0xff]
    %v88 = vld [vmem:[#allocation5 + $0x128] sm:$0xff]
    %v89 = vld [vmem:[#allocation5 + $0x130] sm:$0xff]
    %v90 = vld [vmem:[#allocation5 + $0x138] sm:$0xff]
    %v91 = vld [vmem:[#allocation5 + $0x140] sm:$0xff]
    %v92 = vld [vmem:[#allocation5 + $0x148] sm:$0xff]
    %v93 = vld [vmem:[#allocation5 + $0x150] sm:$0xff]
    %v94 = vld [vmem:[#allocation5 + $0x158] sm:$0xff]
    %v95 = vld [vmem:[#allocation5 + $0x160] sm:$0xff]
    %v96 = vld [vmem:[#allocation5 + $0x168] sm:$0xff]
    %v97 = vld [vmem:[#allocation5 + $0x170] sm:$0xff]
    %v98 = vld [vmem:[#allocation5 + $0x178] sm:$0xff]
    %v99 = vld [vmem:[#allocation5 + $0x180] sm:$0xff]
    %v100 = vld [vmem:[#allocation5 + $0x188] sm:$0xff]
    %v101 = vld [vmem:[#allocation5 + $0x190] sm:$0xff]
    %v102 = vld [vmem:[#allocation5 + $0x198] sm:$0xff]
    %v103 = vld [vmem:[#allocation5 + $0x1a0] sm:$0xff]
    %v104 = vld [vmem:[#allocation5 + $0x1a8] sm:$0xff]
    %v105 = vld [vmem:[#allocation5 + $0x1b0] sm:$0xff]
    %v106 = vld [vmem:[#allocation5 + $0x1b8] sm:$0xff]
    %v107 = vld [vmem:[#allocation5 + $0x1c0] sm:$0xff]
    %v108 = vld [vmem:[#allocation5 + $0x1c8] sm:$0xff]
    %v109 = vld [vmem:[#allocation5 + $0x1d0] sm:$0xff]
    %v110 = vld [vmem:[#allocation5 + $0x1d8] sm:$0xff]
    %v111 = vld [vmem:[#allocation5 + $0x1e0] sm:$0xff]
    %v112 = vld [vmem:[#allocation5 + $0x1e8] sm:$0xff]
    %v113 = vld [vmem:[#allocation5 + $0x1f0] sm:$0xff]
    %v114 = vld [vmem:[#allocation5 + $0x1f8] sm:$0xff]
    %v115 = vld [vmem:[#allocation5 + $0x200] sm:$0xff]
    %v116 = vld [vmem:[#allocation5 + $0x208] sm:$0xff]
    %v117 = vld [vmem:[#allocation5 + $0x210] sm:$0xff]
    %v118 = vld [vmem:[#allocation5 + $0x218] sm:$0xff]
    %v119 = vld [vmem:[#allocation5 + $0x220] sm:$0xff]
    %v120 = vld [vmem:[#allocation5 + $0x228] sm:$0xff]
    %v121 = vld [vmem:[#allocation5 + $0x230] sm:$0xff]
    %v122 = vld [vmem:[#allocation5 + $0x238] sm:$0xff]
    %v123 = vld [vmem:[#allocation5 + $0x240] sm:$0xff]
    %v124 = vld [vmem:[#allocation5 + $0x248] sm:$0xff]
    %v125 = vld [vmem:[#allocation5 + $0x250] sm:$0xff]
    %v126 = vld [vmem:[#allocation5 + $0x258] sm:$0xff]
    %v127 = vld [vmem:[#allocation5 + $0x260] sm:$0xff]
    %v128 = vld [vmem:[#allocation5 + $0x268] sm:$0xff]
    %v129 = vld [vmem:[#allocation5 + $0x270] sm:$0xff]
    %v130 = vld [vmem:[#allocation5 + $0x278] sm:$0xff]
    %v131 = vld [vmem:[#allocation5 + $0x280] sm:$0xff]
    %v132 = vld [vmem:[#allocation5 + $0x288] sm:$0xff]
    %v133 = vld [vmem:[#allocation5 + $0x290] sm:$0xff]
    %v134 = vld [vmem:[#allocation5 + $0x298] sm:$0xff]
    %v135 = vld [vmem:[#allocation5 + $0x2a0] sm:$0xff]
    %v136 = vld [vmem:[#allocation5 + $0x2a8] sm:$0xff]
    %v137 = vld [vmem:[#allocation5 + $0x2b0] sm:$0xff]
    %v138 = vld [vmem:[#allocation5 + $0x2b8] sm:$0xff]
    %v139 = vld [vmem:[#allocation5 + $0x2c0] sm:$0xff]
    %v140 = vld [vmem:[#allocation5 + $0x2c8] sm:$0xff]
    %v141 = vld [vmem:[#allocation5 + $0x2d0] sm:$0xff]
    %v142 = vld [vmem:[#allocation5 + $0x2d8] sm:$0xff]
    %v143 = vld [vmem:[#allocation5 + $0x2e0] sm:$0xff]
    %v144 = vld [vmem:[#allocation5 + $0x2e8] sm:$0xff]
    %v145 = vld [vmem:[#allocation5 + $0x2f0] sm:$0xff]
    %v146 = vld [vmem:[#allocation5 + $0x2f8] sm:$0xff]
    %v147 = vld [vmem:[%s2] sm:$0x1]
    %v149 = vlaneseq
    %v150 = vshrl.u32 %v149, 7
    %v151 = vsub.s32 0, %v150
    %v152 = vrot.slane %v147, %v151
    %v162 = vcombine.low %v43, %v45
    %v163 = vcombine.high %v43, %v45
    %v164 = vcombine.low %v47, %v49
    %v165 = vcombine.high %v47, %v49
    %v167 = vunpack.c.l.s4 1983009808
    %v168 = vunpack.c.0.s8 %v167
    %v169 = vlaneseq
    %v170 = vshrl.u32 %v169, 7
    %v171 = vsub.s32 %v168, %v170
    %v172 = vrot.slane %v162, %v171
    %v174 = vunpack.c.l.s4 1983009808
    %v175 = vunpack.c.0.s8 %v174
    %v176 = vlaneseq
    %v177 = vshrl.u32 %v176, 7
    %v178 = vsub.s32 %v175, %v177
    %v179 = vrot.slane %v163, %v178
    %v181 = vunpack.c.l.s4 1983009808
    %v182 = vunpack.c.0.s8 %v181
    %v183 = vlaneseq
    %v184 = vshrl.u32 %v183, 7
    %v185 = vsub.s32 %v182, %v184
    %v186 = vrot.slane %v164, %v185
    %v188 = vunpack.c.l.s4 1983009808
    %v189 = vunpack.c.0.s8 %v188
    %v190 = vlaneseq
    %v191 = vshrl.u32 %v190, 7
    %v192 = vsub.s32 %v189, %v191
    %v193 = vrot.slane %v165, %v192
    %v194 = vcombine.low %v172, %v186
    %v195 = vcombine.high %v172, %v186
    %v196 = vcombine.low %v179, %v193
    %v197 = vcombine.high %v179, %v193
    %v198 = vcombine.low %v44, %v46
    %v199 = vcombine.low %v48, %v50
    %v201 = vunpack.c.l.s4 1983009808
    %v202 = vunpack.c.0.s8 %v201
    %v203 = vlaneseq
    %v204 = vshrl.u32 %v203, 7
    %v205 = vsub.s32 %v202, %v204
    %v206 = vrot.slane %v198, %v205
    %v208 = vunpack.c.l.s4 1983009808
    %v209 = vunpack.c.0.s8 %v208
    %v210 = vlaneseq
    %v211 = vshrl.u32 %v210, 7
    %v212 = vsub.s32 %v209, %v211
    %v213 = vrot.slane %v199, %v212
    %v214 = vcombine.low %v206, %v213
    %v215 = vcombine.high %v206, %v213
    %222 = vmatprep.subr.mxu0 0.0
    %v223 = vand.u32 %v51, 4294901760
    %224 = vmatpush1.msra.mxu0 %v223
    %225 = vmatprep.subr.mxu0 0.0
    %v226 = vand.u32 %v52, 4294901760
    %227 = vmatpush1.msra.mxu0 %v226
    %228 = vmatprep.subr.mxu0 0.0
    %v229 = vand.u32 %v53, 4294901760
    %230 = vmatpush1.msra.mxu0 %v229
    %231 = vmatprep.subr.mxu0 0.0
    %v232 = vand.u32 %v54, 4294901760
    %233 = vmatpush1.msra.mxu0 %v232
    %234 = vmatprep.subr.mxu0 0.0
    %v235 = vand.u32 %v55, 4294901760
    %236 = vmatpush1.msra.mxu0 %v235
    %237 = vmatprep.subr.mxu0 0.0
    %v238 = vand.u32 %v56, 4294901760
    %239 = vmatpush1.msra.mxu0 %v238
    %240 = vmatprep.subr.mxu0 0.0
    %v241 = vand.u32 %v57, 4294901760
    %242 = vmatpush1.msra.mxu0 %v241
    %243 = vmatprep.subr.mxu0 0.0
    %v244 = vand.u32 %v58, 4294901760
    %245 = vmatpush1.msra.mxu0 %v244
    %246 = vmatprep.subr.mxu0 0.0
    %v247 = vand.u32 %v59, 4294901760
    %248 = vmatpush1.msra.mxu0 %v247
    %249 = vmatprep.subr.mxu0 0.0
    %v250 = vand.u32 %v60, 4294901760
    %251 = vmatpush1.msra.mxu0 %v250
    %252 = vmatprep.subr.mxu0 0.0
    %v253 = vand.u32 %v61, 4294901760
    %254 = vmatpush1.msra.mxu0 %v253
    %255 = vmatprep.subr.mxu0 0.0
    %v256 = vand.u32 %v62, 4294901760
    %257 = vmatpush1.msra.mxu0 %v256
    %258 = vmatprep.subr.mxu0 0.0
    %v259 = vand.u32 %v63, 4294901760
    %260 = vmatpush1.msra.mxu0 %v259
    %261 = vmatprep.subr.mxu0 0.0
    %v262 = vand.u32 %v64, 4294901760
    %263 = vmatpush1.msra.mxu0 %v262
    %264 = vmatprep.subr.mxu0 0.0
    %v265 = vand.u32 %v65, 4294901760
    %266 = vmatpush1.msra.mxu0 %v265
    %267 = vmatprep.subr.mxu0 0.0
    %v268 = vand.u32 %v66, 4294901760
    %269 = vmatpush1.msra.mxu0 %v268
    %270 = vmatprep.subr.mxu0 0.0
    %v271 = vand.u32 %v67, 4294901760
    %272 = vmatpush1.msra.mxu0 %v271
    %273 = vmatprep.subr.mxu0 0.0
    %v274 = vand.u32 %v68, 4294901760
    %275 = vmatpush1.msra.mxu0 %v274
    %276 = vmatprep.subr.mxu0 0.0
    %v277 = vand.u32 %v69, 4294901760
    %278 = vmatpush1.msra.mxu0 %v277
    %279 = vmatprep.subr.mxu0 0.0
    %v280 = vand.u32 %v70, 4294901760
    %281 = vmatpush1.msra.mxu0 %v280
    %282 = vmatprep.subr.mxu0 0.0
    %v283 = vand.u32 %v71, 4294901760
    %284 = vmatpush1.msra.mxu0 %v283
    %285 = vmatprep.subr.mxu0 0.0
    %v286 = vand.u32 %v72, 4294901760
    %287 = vmatpush1.msra.mxu0 %v286
    %288 = vmatprep.subr.mxu0 0.0
    %v289 = vand.u32 %v73, 4294901760
    %290 = vmatpush1.msra.mxu0 %v289
    %291 = vmatprep.subr.mxu0 0.0
    %v292 = vand.u32 %v74, 4294901760
    %293 = vmatpush1.msra.mxu0 %v292
    %294 = vmatprep.subr.mxu0 0.0
    %v295 = vand.u32 %v75, 4294901760
    %296 = vmatpush1.msra.mxu0 %v295
    %297 = vmatprep.subr.mxu0 0.0
    %v298 = vand.u32 %v76, 4294901760
    %299 = vmatpush1.msra.mxu0 %v298
    %300 = vmatprep.subr.mxu0 0.0
    %v301 = vand.u32 %v77, 4294901760
    %302 = vmatpush1.msra.mxu0 %v301
    %303 = vmatprep.subr.mxu0 0.0
    %v304 = vand.u32 %v78, 4294901760
    %305 = vmatpush1.msra.mxu0 %v304
    %306 = vmatprep.subr.mxu0 0.0
    %v307 = vand.u32 %v79, 4294901760
    %308 = vmatpush1.msra.mxu0 %v307
    %309 = vmatprep.subr.mxu0 0.0
    %v310 = vand.u32 %v80, 4294901760
    %311 = vmatpush1.msra.mxu0 %v310
    %312 = vmatprep.subr.mxu0 0.0
    %v313 = vand.u32 %v81, 4294901760
    %314 = vmatpush1.msra.mxu0 %v313
    %315 = vmatprep.subr.mxu0 0.0
    %v316 = vand.u32 %v82, 4294901760
    %317 = vmatpush1.msra.mxu0 %v316
    %v318 = vand.u32 %v195, 4294901760
    %v319 = vsub.f32 %v195, %v318
    %v320 = vand.u32 %v319, 4294901760
    %v321 = vsub.f32 %v319, %v320
    %v322 = vand.u32 %v321, 4294901760
    %323 = vmatprep.mubr.f32.mxu0 %v322
    %v324 = vand.u32 %v194, 4294901760
    %v325 = vsub.f32 %v194, %v324
    %v326 = vand.u32 %v325, 4294901760
    %v327 = vsub.f32 %v325, %v326
    %v328 = vand.u32 %v327, 4294901760
    %329 = vmatmul.mubr.f32.gmra.mrb[0].mxu0 %v328
    %v330 = vpop.f32.mrb[0].mxu0
    %v331 = vadd.f32 %v152, %v330
    %v332 = vpop.f32.mrb[0].mxu0
    %333 = vdwg.mxu0
    %334 = vmatprep.subr.mxu0 0.0
    %v335 = vand.u32 %v51, 4294901760
    %v336 = vsub.f32 %v51, %v335
    %v337 = vand.u32 %v336, 4294901760
    %v338 = vsub.f32 %v336, %v337
    %v339 = vand.u32 %v338, 4294901760
    %340 = vmatpush1.msra.mxu0 %v339
    %341 = vmatprep.subr.mxu0 0.0
    %v342 = vand.u32 %v52, 4294901760
    %v343 = vsub.f32 %v52, %v342
    %v344 = vand.u32 %v343, 4294901760
    %v345 = vsub.f32 %v343, %v344
    %v346 = vand.u32 %v345, 4294901760
    %347 = vmatpush1.msra.mxu0 %v346
    %348 = vmatprep.subr.mxu0 0.0
    %v349 = vand.u32 %v53, 4294901760
    %v350 = vsub.f32 %v53, %v349
    %v351 = vand.u32 %v350, 4294901760
    %v352 = vsub.f32 %v350, %v351
    %v353 = vand.u32 %v352, 4294901760
    %354 = vmatpush1.msra.mxu0 %v353
    %355 = vmatprep.subr.mxu0 0.0
    %v356 = vand.u32 %v54, 4294901760
    %v357 = vsub.f32 %v54, %v356
    %v358 = vand.u32 %v357, 4294901760
    %v359 = vsub.f32 %v357, %v358
    %v360 = vand.u32 %v359, 4294901760
    %361 = vmatpush1.msra.mxu0 %v360
    %362 = vmatprep.subr.mxu0 0.0
    %v363 = vand.u32 %v55, 4294901760
    %v364 = vsub.f32 %v55, %v363
    %v365 = vand.u32 %v364, 4294901760
    %v366 = vsub.f32 %v364, %v365
    %v367 = vand.u32 %v366, 4294901760
    %368 = vmatpush1.msra.mxu0 %v367
    %369 = vmatprep.subr.mxu0 0.0
    %v370 = vand.u32 %v56, 4294901760
    %v371 = vsub.f32 %v56, %v370
    %v372 = vand.u32 %v371, 4294901760
    %v373 = vsub.f32 %v371, %v372
    %v374 = vand.u32 %v373, 4294901760
    %375 = vmatpush1.msra.mxu0 %v374
    %376 = vmatprep.subr.mxu0 0.0
    %v377 = vand.u32 %v57, 4294901760
    %v378 = vsub.f32 %v57, %v377
    %v379 = vand.u32 %v378, 4294901760
    %v380 = vsub.f32 %v378, %v379
    %v381 = vand.u32 %v380, 4294901760
    %382 = vmatpush1.msra.mxu0 %v381
    %383 = vmatprep.subr.mxu0 0.0
    %v384 = vand.u32 %v58, 4294901760
    %v385 = vsub.f32 %v58, %v384
    %v386 = vand.u32 %v385, 4294901760
    %v387 = vsub.f32 %v385, %v386
    %v388 = vand.u32 %v387, 4294901760
    %389 = vmatpush1.msra.mxu0 %v388
    %390 = vmatprep.subr.mxu0 0.0
    %v391 = vand.u32 %v59, 4294901760
    %v392 = vsub.f32 %v59, %v391
    %v393 = vand.u32 %v392, 4294901760
    %v394 = vsub.f32 %v392, %v393
    %v395 = vand.u32 %v394, 4294901760
    %396 = vmatpush1.msra.mxu0 %v395
    %397 = vmatprep.subr.mxu0 0.0
    %v398 = vand.u32 %v60, 4294901760
    %v399 = vsub.f32 %v60, %v398
    %v400 = vand.u32 %v399, 4294901760
    %v401 = vsub.f32 %v399, %v400
    %v402 = vand.u32 %v401, 4294901760
    %403 = vmatpush1.msra.mxu0 %v402
    %404 = vmatprep.subr.mxu0 0.0
    %v405 = vand.u32 %v61, 4294901760
    %v406 = vsub.f32 %v61, %v405
    %v407 = vand.u32 %v406, 4294901760
    %v408 = vsub.f32 %v406, %v407
    %v409 = vand.u32 %v408, 4294901760
    %410 = vmatpush1.msra.mxu0 %v409
    %411 = vmatprep.subr.mxu0 0.0
    %v412 = vand.u32 %v62, 4294901760
    %v413 = vsub.f32 %v62, %v412
    %v414 = vand.u32 %v413, 4294901760
    %v415 = vsub.f32 %v413, %v414
    %v416 = vand.u32 %v415, 4294901760
    %417 = vmatpush1.msra.mxu0 %v416
    %418 = vmatprep.subr.mxu0 0.0
    %v419 = vand.u32 %v63, 4294901760
    %v420 = vsub.f32 %v63, %v419
    %v421 = vand.u32 %v420, 4294901760
    %v422 = vsub.f32 %v420, %v421
    %v423 = vand.u32 %v422, 4294901760
    %424 = vmatpush1.msra.mxu0 %v423
    %425 = vmatprep.subr.mxu0 0.0
    %v426 = vand.u32 %v64, 4294901760
    %v427 = vsub.f32 %v64, %v426
    %v428 = vand.u32 %v427, 4294901760
    %v429 = vsub.f32 %v427, %v428
    %v430 = vand.u32 %v429, 4294901760
    %431 = vmatpush1.msra.mxu0 %v430
    %432 = vmatprep.subr.mxu0 0.0
    %v433 = vand.u32 %v65, 4294901760
    %v434 = vsub.f32 %v65, %v433
    %v435 = vand.u32 %v434, 4294901760
    %v436 = vsub.f32 %v434, %v435
    %v437 = vand.u32 %v436, 4294901760
    %438 = vmatpush1.msra.mxu0 %v437
    %439 = vmatprep.subr.mxu0 0.0
    %v440 = vand.u32 %v66, 4294901760
    %v441 = vsub.f32 %v66, %v440
    %v442 = vand.u32 %v441, 4294901760
    %v443 = vsub.f32 %v441, %v442
    %v444 = vand.u32 %v443, 4294901760
    %445 = vmatpush1.msra.mxu0 %v444
    %446 = vmatprep.subr.mxu0 0.0
    %v447 = vand.u32 %v67, 4294901760
    %v448 = vsub.f32 %v67, %v447
    %v449 = vand.u32 %v448, 4294901760
    %v450 = vsub.f32 %v448, %v449
    %v451 = vand.u32 %v450, 4294901760
    %452 = vmatpush1.msra.mxu0 %v451
    %453 = vmatprep.subr.mxu0 0.0
    %v454 = vand.u32 %v68, 4294901760
    %v455 = vsub.f32 %v68, %v454
    %v456 = vand.u32 %v455, 4294901760
    %v457 = vsub.f32 %v455, %v456
    %v458 = vand.u32 %v457, 4294901760
    %459 = vmatpush1.msra.mxu0 %v458
    %460 = vmatprep.subr.mxu0 0.0
    %v461 = vand.u32 %v69, 4294901760
    %v462 = vsub.f32 %v69, %v461
    %v463 = vand.u32 %v462, 4294901760
    %v464 = vsub.f32 %v462, %v463
    %v465 = vand.u32 %v464, 4294901760
    %466 = vmatpush1.msra.mxu0 %v465
    %467 = vmatprep.subr.mxu0 0.0
    %v468 = vand.u32 %v70, 4294901760
    %v469 = vsub.f32 %v70, %v468
    %v470 = vand.u32 %v469, 4294901760
    %v471 = vsub.f32 %v469, %v470
    %v472 = vand.u32 %v471, 4294901760
    %473 = vmatpush1.msra.mxu0 %v472
    %474 = vmatprep.subr.mxu0 0.0
    %v475 = vand.u32 %v71, 4294901760
    %v476 = vsub.f32 %v71, %v475
    %v477 = vand.u32 %v476, 4294901760
    %v478 = vsub.f32 %v476, %v477
    %v479 = vand.u32 %v478, 4294901760
    %480 = vmatpush1.msra.mxu0 %v479
    %481 = vmatprep.subr.mxu0 0.0
    %v482 = vand.u32 %v72, 4294901760
    %v483 = vsub.f32 %v72, %v482
    %v484 = vand.u32 %v483, 4294901760
    %v485 = vsub.f32 %v483, %v484
    %v486 = vand.u32 %v485, 4294901760
    %487 = vmatpush1.msra.mxu0 %v486
    %488 = vmatprep.subr.mxu0 0.0
    %v489 = vand.u32 %v73, 4294901760
    %v490 = vsub.f32 %v73, %v489
    %v491 = vand.u32 %v490, 4294901760
    %v492 = vsub.f32 %v490, %v491
    %v493 = vand.u32 %v492, 4294901760
    %494 = vmatpush1.msra.mxu0 %v493
    %495 = vmatprep.subr.mxu0 0.0
    %v496 = vand.u32 %v74, 4294901760
    %v497 = vsub.f32 %v74, %v496
    %v498 = vand.u32 %v497, 4294901760
    %v499 = vsub.f32 %v497, %v498
    %v500 = vand.u32 %v499, 4294901760
    %501 = vmatpush1.msra.mxu0 %v500
    %502 = vmatprep.subr.mxu0 0.0
    %v503 = vand.u32 %v75, 4294901760
    %v504 = vsub.f32 %v75, %v503
    %v505 = vand.u32 %v504, 4294901760
    %v506 = vsub.f32 %v504, %v505
    %v507 = vand.u32 %v506, 4294901760
    %508 = vmatpush1.msra.mxu0 %v507
    %509 = vmatprep.subr.mxu0 0.0
    %v510 = vand.u32 %v76, 4294901760
    %v511 = vsub.f32 %v76, %v510
    %v512 = vand.u32 %v511, 4294901760
    %v513 = vsub.f32 %v511, %v512
    %v514 = vand.u32 %v513, 4294901760
    %515 = vmatpush1.msra.mxu0 %v514
    %516 = vmatprep.subr.mxu0 0.0
    %v517 = vand.u32 %v77, 4294901760
    %v518 = vsub.f32 %v77, %v517
    %v519 = vand.u32 %v518, 4294901760
    %v520 = vsub.f32 %v518, %v519
    %v521 = vand.u32 %v520, 4294901760
    %522 = vmatpush1.msra.mxu0 %v521
    %523 = vmatprep.subr.mxu0 0.0
    %v524 = vand.u32 %v78, 4294901760
    %v525 = vsub.f32 %v78, %v524
    %v526 = vand.u32 %v525, 4294901760
    %v527 = vsub.f32 %v525, %v526
    %v528 = vand.u32 %v527, 4294901760
    %529 = vmatpush1.msra.mxu0 %v528
    %530 = vmatprep.subr.mxu0 0.0
    %v531 = vand.u32 %v79, 4294901760
    %v532 = vsub.f32 %v79, %v531
    %v533 = vand.u32 %v532, 4294901760
    %v534 = vsub.f32 %v532, %v533
    %v535 = vand.u32 %v534, 4294901760
    %536 = vmatpush1.msra.mxu0 %v535
    %537 = vmatprep.subr.mxu0 0.0
    %v538 = vand.u32 %v80, 4294901760
    %v539 = vsub.f32 %v80, %v538
    %v540 = vand.u32 %v539, 4294901760
    %v541 = vsub.f32 %v539, %v540
    %v542 = vand.u32 %v541, 4294901760
    %543 = vmatpush1.msra.mxu0 %v542
    %544 = vmatprep.subr.mxu0 0.0
    %v545 = vand.u32 %v81, 4294901760
    %v546 = vsub.f32 %v81, %v545
    %v547 = vand.u32 %v546, 4294901760
    %v548 = vsub.f32 %v546, %v547
    %v549 = vand.u32 %v548, 4294901760
    %550 = vmatpush1.msra.mxu0 %v549
    %551 = vmatprep.subr.mxu0 0.0
    %v552 = vand.u32 %v82, 4294901760
    %v553 = vsub.f32 %v82, %v552
    %v554 = vand.u32 %v553, 4294901760
    %v555 = vsub.f32 %v553, %v554
    %v556 = vand.u32 %v555, 4294901760
    %557 = vmatpush1.msra.mxu0 %v556
    %v558 = vand.u32 %v195, 4294901760
    %559 = vmatprep.mubr.f32.mxu0 %v558
    %v560 = vand.u32 %v194, 4294901760
    %561 = vmatmul.mubr.f32.gmra.mrb[0].mxu0 %v560
    %v562 = vpop.f32.mrb[0].mxu0
    %v563 = vadd.f32 %v331, %v562
    %v564 = vpop.f32.mrb[0].mxu0
    %565 = vdwg.mxu0
    %566 = vmatprep.subr.mxu0 0.0
    %v567 = vand.u32 %v51, 4294901760
    %v568 = vsub.f32 %v51, %v567
    %569 = vmatpush1.msra.mxu0 %v568
    %570 = vmatprep.subr.mxu0 0.0
    %v571 = vand.u32 %v52, 4294901760
    %v572 = vsub.f32 %v52, %v571
    %573 = vmatpush1.msra.mxu0 %v572
    %574 = vmatprep.subr.mxu0 0.0
    %v575 = vand.u32 %v53, 4294901760
    %v576 = vsub.f32 %v53, %v575
    %577 = vmatpush1.msra.mxu0 %v576
    %578 = vmatprep.subr.mxu0 0.0
    %v579 = vand.u32 %v54, 4294901760
    %v580 = vsub.f32 %v54, %v579
    %581 = vmatpush1.msra.mxu0 %v580
    %582 = vmatprep.subr.mxu0 0.0
    %v583 = vand.u32 %v55, 4294901760
    %v584 = vsub.f32 %v55, %v583
    %585 = vmatpush1.msra.mxu0 %v584
    %586 = vmatprep.subr.mxu0 0.0
    %v587 = vand.u32 %v56, 4294901760
    %v588 = vsub.f32 %v56, %v587
    %589 = vmatpush1.msra.mxu0 %v588
    %590 = vmatprep.subr.mxu0 0.0
    %v591 = vand.u32 %v57, 4294901760
    %v592 = vsub.f32 %v57, %v591
    %593 = vmatpush1.msra.mxu0 %v592
    %594 = vmatprep.subr.mxu0 0.0
    %v595 = vand.u32 %v58, 4294901760
    %v596 = vsub.f32 %v58, %v595
    %597 = vmatpush1.msra.mxu0 %v596
    %598 = vmatprep.subr.mxu0 0.0
    %v599 = vand.u32 %v59, 4294901760
    %v600 = vsub.f32 %v59, %v599
    %601 = vmatpush1.msra.mxu0 %v600
    %602 = vmatprep.subr.mxu0 0.0
    %v603 = vand.u32 %v60, 4294901760
    %v604 = vsub.f32 %v60, %v603
    %605 = vmatpush1.msra.mxu0 %v604
    %606 = vmatprep.subr.mxu0 0.0
    %v607 = vand.u32 %v61, 4294901760
    %v608 = vsub.f32 %v61, %v607
    %609 = vmatpush1.msra.mxu0 %v608
    %610 = vmatprep.subr.mxu0 0.0
    %v611 = vand.u32 %v62, 4294901760
    %v612 = vsub.f32 %v62, %v611
    %613 = vmatpush1.msra.mxu0 %v612
    %614 = vmatprep.subr.mxu0 0.0
    %v615 = vand.u32 %v63, 4294901760
    %v616 = vsub.f32 %v63, %v615
    %617 = vmatpush1.msra.mxu0 %v616
    %618 = vmatprep.subr.mxu0 0.0
    %v619 = vand.u32 %v64, 4294901760
    %v620 = vsub.f32 %v64, %v619
    %621 = vmatpush1.msra.mxu0 %v620
    %622 = vmatprep.subr.mxu0 0.0
    %v623 = vand.u32 %v65, 4294901760
    %v624 = vsub.f32 %v65, %v623
    %625 = vmatpush1.msra.mxu0 %v624
    %626 = vmatprep.subr.mxu0 0.0
    %v627 = vand.u32 %v66, 4294901760
    %v628 = vsub.f32 %v66, %v627
    %629 = vmatpush1.msra.mxu0 %v628
    %630 = vmatprep.subr.mxu0 0.0
    %v631 = vand.u32 %v67, 4294901760
    %v632 = vsub.f32 %v67, %v631
    %633 = vmatpush1.msra.mxu0 %v632
    %634 = vmatprep.subr.mxu0 0.0
    %v635 = vand.u32 %v68, 4294901760
    %v636 = vsub.f32 %v68, %v635
    %637 = vmatpush1.msra.mxu0 %v636
    %638 = vmatprep.subr.mxu0 0.0
    %v639 = vand.u32 %v69, 4294901760
    %v640 = vsub.f32 %v69, %v639
    %641 = vmatpush1.msra.mxu0 %v640
    %642 = vmatprep.subr.mxu0 0.0
    %v643 = vand.u32 %v70, 4294901760
    %v644 = vsub.f32 %v70, %v643
    %645 = vmatpush1.msra.mxu0 %v644
    %646 = vmatprep.subr.mxu0 0.0
    %v647 = vand.u32 %v71, 4294901760
    %v648 = vsub.f32 %v71, %v647
    %649 = vmatpush1.msra.mxu0 %v648
    %650 = vmatprep.subr.mxu0 0.0
    %v651 = vand.u32 %v72, 4294901760
    %v652 = vsub.f32 %v72, %v651
    %653 = vmatpush1.msra.mxu0 %v652
    %654 = vmatprep.subr.mxu0 0.0
    %v655 = vand.u32 %v73, 4294901760
    %v656 = vsub.f32 %v73, %v655
    %657 = vmatpush1.msra.mxu0 %v656
    %658 = vmatprep.subr.mxu0 0.0
    %v659 = vand.u32 %v74, 4294901760
    %v660 = vsub.f32 %v74, %v659
    %661 = vmatpush1.msra.mxu0 %v660
    %662 = vmatprep.subr.mxu0 0.0
    %v663 = vand.u32 %v75, 4294901760
    %v664 = vsub.f32 %v75, %v663
    %665 = vmatpush1.msra.mxu0 %v664
    %666 = vmatprep.subr.mxu0 0.0
    %v667 = vand.u32 %v76, 4294901760
    %v668 = vsub.f32 %v76, %v667
    %669 = vmatpush1.msra.mxu0 %v668
    %670 = vmatprep.subr.mxu0 0.0
    %v671 = vand.u32 %v77, 4294901760
    %v672 = vsub.f32 %v77, %v671
    %673 = vmatpush1.msra.mxu0 %v672
    %674 = vmatprep.subr.mxu0 0.0
    %v675 = vand.u32 %v78, 4294901760
    %v676 = vsub.f32 %v78, %v675
    %677 = vmatpush1.msra.mxu0 %v676
    %678 = vmatprep.subr.mxu0 0.0
    %v679 = vand.u32 %v79, 4294901760
    %v680 = vsub.f32 %v79, %v679
    %681 = vmatpush1.msra.mxu0 %v680
    %682 = vmatprep.subr.mxu0 0.0
    %v683 = vand.u32 %v80, 4294901760
    %v684 = vsub.f32 %v80, %v683
    %685 = vmatpush1.msra.mxu0 %v684
    %686 = vmatprep.subr.mxu0 0.0
    %v687 = vand.u32 %v81, 4294901760
    %v688 = vsub.f32 %v81, %v687
    %689 = vmatpush1.msra.mxu0 %v688
    %690 = vmatprep.subr.mxu0 0.0
    %v691 = vand.u32 %v82, 4294901760
    %v692 = vsub.f32 %v82, %v691
    %693 = vmatpush1.msra.mxu0 %v692
    %v694 = vand.u32 %v195, 4294901760
    %v695 = vsub.f32 %v195, %v694
    %696 = vmatprep.mubr.f32.mxu0 %v695
    %v697 = vand.u32 %v194, 4294901760
    %v698 = vsub.f32 %v194, %v697
    %699 = vmatmul.mubr.f32.gmra.mrb[0].mxu0 %v698
    %v700 = vpop.f32.mrb[0].mxu0
    %v701 = vadd.f32 %v563, %v700
    %v702 = vpop.f32.mrb[0].mxu0
    %703 = vdwg.mxu0
    %704 = vmatprep.subr.mxu0 0.0
    %v705 = vand.u32 %v51, 4294901760
    %706 = vmatpush1.msra.mxu0 %v705
    %707 = vmatprep.subr.mxu0 0.0
    %v708 = vand.u32 %v52, 4294901760
    %709 = vmatpush1.msra.mxu0 %v708
    %710 = vmatprep.subr.mxu0 0.0
    %v711 = vand.u32 %v53, 4294901760
    %712 = vmatpush1.msra.mxu0 %v711
    %713 = vmatprep.subr.mxu0 0.0
    %v714 = vand.u32 %v54, 4294901760
    %715 = vmatpush1.msra.mxu0 %v714
    %716 = vmatprep.subr.mxu0 0.0
    %v717 = vand.u32 %v55, 4294901760
    %718 = vmatpush1.msra.mxu0 %v717
    %719 = vmatprep.subr.mxu0 0.0
    %v720 = vand.u32 %v56, 4294901760
    %721 = vmatpush1.msra.mxu0 %v720
    %722 = vmatprep.subr.mxu0 0.0
    %v723 = vand.u32 %v57, 4294901760
    %724 = vmatpush1.msra.mxu0 %v723
    %725 = vmatprep.subr.mxu0 0.0
    %v726 = vand.u32 %v58, 4294901760
    %727 = vmatpush1.msra.mxu0 %v726
    %728 = vmatprep.subr.mxu0 0.0
    %v729 = vand.u32 %v59, 4294901760
    %730 = vmatpush1.msra.mxu0 %v729
    %731 = vmatprep.subr.mxu0 0.0
    %v732 = vand.u32 %v60, 4294901760
    %733 = vmatpush1.msra.mxu0 %v732
    %734 = vmatprep.subr.mxu0 0.0
    %v735 = vand.u32 %v61, 4294901760
    %736 = vmatpush1.msra.mxu0 %v735
    %737 = vmatprep.subr.mxu0 0.0
    %v738 = vand.u32 %v62, 4294901760
    %739 = vmatpush1.msra.mxu0 %v738
    %740 = vmatprep.subr.mxu0 0.0
    %v741 = vand.u32 %v63, 4294901760
    %742 = vmatpush1.msra.mxu0 %v741
    %743 = vmatprep.subr.mxu0 0.0
    %v744 = vand.u32 %v64, 4294901760
    %745 = vmatpush1.msra.mxu0 %v744
    %746 = vmatprep.subr.mxu0 0.0
    %v747 = vand.u32 %v65, 4294901760
    %748 = vmatpush1.msra.mxu0 %v747
    %749 = vmatprep.subr.mxu0 0.0
    %v750 = vand.u32 %v66, 4294901760
    %751 = vmatpush1.msra.mxu0 %v750
    %752 = vmatprep.subr.mxu0 0.0
    %v753 = vand.u32 %v67, 4294901760
    %754 = vmatpush1.msra.mxu0 %v753
    %755 = vmatprep.subr.mxu0 0.0
    %v756 = vand.u32 %v68, 4294901760
    %757 = vmatpush1.msra.mxu0 %v756
    %758 = vmatprep.subr.mxu0 0.0
    %v759 = vand.u32 %v69, 4294901760
    %760 = vmatpush1.msra.mxu0 %v759
    %761 = vmatprep.subr.mxu0 0.0
    %v762 = vand.u32 %v70, 4294901760
    %763 = vmatpush1.msra.mxu0 %v762
    %764 = vmatprep.subr.mxu0 0.0
    %v765 = vand.u32 %v71, 4294901760
    %766 = vmatpush1.msra.mxu0 %v765
    %767 = vmatprep.subr.mxu0 0.0
    %v768 = vand.u32 %v72, 4294901760
    %769 = vmatpush1.msra.mxu0 %v768
    %770 = vmatprep.subr.mxu0 0.0
    %v771 = vand.u32 %v73, 4294901760
    %772 = vmatpush1.msra.mxu0 %v771
    %773 = vmatprep.subr.mxu0 0.0
    %v774 = vand.u32 %v74, 4294901760
    %775 = vmatpush1.msra.mxu0 %v774
    %776 = vmatprep.subr.mxu0 0.0
    %v777 = vand.u32 %v75, 4294901760
    %778 = vmatpush1.msra.mxu0 %v777
    %779 = vmatprep.subr.mxu0 0.0
    %v780 = vand.u32 %v76, 4294901760
    %781 = vmatpush1.msra.mxu0 %v780
    %782 = vmatprep.subr.mxu0 0.0
    %v783 = vand.u32 %v77, 4294901760
    %784 = vmatpush1.msra.mxu0 %v783
    %785 = vmatprep.subr.mxu0 0.0
    %v786 = vand.u32 %v78, 4294901760
    %787 = vmatpush1.msra.mxu0 %v786
    %788 = vmatprep.subr.mxu0 0.0
    %v789 = vand.u32 %v79, 4294901760
    %790 = vmatpush1.msra.mxu0 %v789
    %791 = vmatprep.subr.mxu0 0.0
    %v792 = vand.u32 %v80, 4294901760
    %793 = vmatpush1.msra.mxu0 %v792
    %794 = vmatprep.subr.mxu0 0.0
    %v795 = vand.u32 %v81, 4294901760
    %796 = vmatpush1.msra.mxu0 %v795
    %797 = vmatprep.subr.mxu0 0.0
    %v798 = vand.u32 %v82, 4294901760
    %799 = vmatpush1.msra.mxu0 %v798
    %v800 = vand.u32 %v195, 4294901760
    %v801 = vsub.f32 %v195, %v800
    %v802 = vand.u32 %v801, 4294901760
    %803 = vmatprep.mubr.f32.mxu0 %v802
    %v804 = vand.u32 %v194, 4294901760
    %v805 = vsub.f32 %v194, %v804
    %v806 = vand.u32 %v805, 4294901760
    %807 = vmatmul.mubr.f32.gmra.mrb[0].mxu0 %v806
    %v808 = vpop.f32.mrb[0].mxu0
    %v809 = vadd.f32 %v701, %v808
    %v810 = vpop.f32.mrb[0].mxu0
    %811 = vdwg.mxu0
    %812 = vmatprep.subr.mxu0 0.0
    %v813 = vand.u32 %v51, 4294901760
    %v814 = vsub.f32 %v51, %v813
    %v815 = vand.u32 %v814, 4294901760
    %816 = vmatpush1.msra.mxu0 %v815
    %817 = vmatprep.subr.mxu0 0.0
    %v818 = vand.u32 %v52, 4294901760
    %v819 = vsub.f32 %v52, %v818
    %v820 = vand.u32 %v819, 4294901760
    %821 = vmatpush1.msra.mxu0 %v820
    %822 = vmatprep.subr.mxu0 0.0
    %v823 = vand.u32 %v53, 4294901760
    %v824 = vsub.f32 %v53, %v823
    %v825 = vand.u32 %v824, 4294901760
    %826 = vmatpush1.msra.mxu0 %v825
    %827 = vmatprep.subr.mxu0 0.0
    %v828 = vand.u32 %v54, 4294901760
    %v829 = vsub.f32 %v54, %v828
    %v830 = vand.u32 %v829, 4294901760
    %831 = vmatpush1.msra.mxu0 %v830
    %832 = vmatprep.subr.mxu0 0.0
    %v833 = vand.u32 %v55, 4294901760
    %v834 = vsub.f32 %v55, %v833
    %v835 = vand.u32 %v834, 4294901760
    %836 = vmatpush1.msra.mxu0 %v835
    %837 = vmatprep.subr.mxu0 0.0
    %v838 = vand.u32 %v56, 4294901760
    %v839 = vsub.f32 %v56, %v838
    %v840 = vand.u32 %v839, 4294901760
    %841 = vmatpush1.msra.mxu0 %v840
    %842 = vmatprep.subr.mxu0 0.0
    %v843 = vand.u32 %v57, 4294901760
    %v844 = vsub.f32 %v57, %v843
    %v845 = vand.u32 %v844, 4294901760
    %846 = vmatpush1.msra.mxu0 %v845
    %847 = vmatprep.subr.mxu0 0.0
    %v848 = vand.u32 %v58, 4294901760
    %v849 = vsub.f32 %v58, %v848
    %v850 = vand.u32 %v849, 4294901760
    %851 = vmatpush1.msra.mxu0 %v850
    %852 = vmatprep.subr.mxu0 0.0
    %v853 = vand.u32 %v59, 4294901760
    %v854 = vsub.f32 %v59, %v853
    %v855 = vand.u32 %v854, 4294901760
    %856 = vmatpush1.msra.mxu0 %v855
    %857 = vmatprep.subr.mxu0 0.0
    %v858 = vand.u32 %v60, 4294901760
    %v859 = vsub.f32 %v60, %v858
    %v860 = vand.u32 %v859, 4294901760
    %861 = vmatpush1.msra.mxu0 %v860
    %862 = vmatprep.subr.mxu0 0.0
    %v863 = vand.u32 %v61, 4294901760
    %v864 = vsub.f32 %v61, %v863
    %v865 = vand.u32 %v864, 4294901760
    %866 = vmatpush1.msra.mxu0 %v865
    %867 = vmatprep.subr.mxu0 0.0
    %v868 = vand.u32 %v62, 4294901760
    %v869 = vsub.f32 %v62, %v868
    %v870 = vand.u32 %v869, 4294901760
    %871 = vmatpush1.msra.mxu0 %v870
    %872 = vmatprep.subr.mxu0 0.0
    %v873 = vand.u32 %v63, 4294901760
    %v874 = vsub.f32 %v63, %v873
    %v875 = vand.u32 %v874, 4294901760
    %876 = vmatpush1.msra.mxu0 %v875
    %877 = vmatprep.subr.mxu0 0.0
    %v878 = vand.u32 %v64, 4294901760
    %v879 = vsub.f32 %v64, %v878
    %v880 = vand.u32 %v879, 4294901760
    %881 = vmatpush1.msra.mxu0 %v880
    %882 = vmatprep.subr.mxu0 0.0
    %v883 = vand.u32 %v65, 4294901760
    %v884 = vsub.f32 %v65, %v883
    %v885 = vand.u32 %v884, 4294901760
    %886 = vmatpush1.msra.mxu0 %v885
    %887 = vmatprep.subr.mxu0 0.0
    %v888 = vand.u32 %v66, 4294901760
    %v889 = vsub.f32 %v66, %v888
    %v890 = vand.u32 %v889, 4294901760
    %891 = vmatpush1.msra.mxu0 %v890
    %892 = vmatprep.subr.mxu0 0.0
    %v893 = vand.u32 %v67, 4294901760
    %v894 = vsub.f32 %v67, %v893
    %v895 = vand.u32 %v894, 4294901760
    %896 = vmatpush1.msra.mxu0 %v895
    %897 = vmatprep.subr.mxu0 0.0
    %v898 = vand.u32 %v68, 4294901760
    %v899 = vsub.f32 %v68, %v898
    %v900 = vand.u32 %v899, 4294901760
    %901 = vmatpush1.msra.mxu0 %v900
    %902 = vmatprep.subr.mxu0 0.0
    %v903 = vand.u32 %v69, 4294901760
    %v904 = vsub.f32 %v69, %v903
    %v905 = vand.u32 %v904, 4294901760
    %906 = vmatpush1.msra.mxu0 %v905
    %907 = vmatprep.subr.mxu0 0.0
    %v908 = vand.u32 %v70, 4294901760
    %v909 = vsub.f32 %v70, %v908
    %v910 = vand.u32 %v909, 4294901760
    %911 = vmatpush1.msra.mxu0 %v910
    %912 = vmatprep.subr.mxu0 0.0
    %v913 = vand.u32 %v71, 4294901760
    %v914 = vsub.f32 %v71, %v913
    %v915 = vand.u32 %v914, 4294901760
    %916 = vmatpush1.msra.mxu0 %v915
    %917 = vmatprep.subr.mxu0 0.0
    %v918 = vand.u32 %v72, 4294901760
    %v919 = vsub.f32 %v72, %v918
    %v920 = vand.u32 %v919, 4294901760
    %921 = vmatpush1.msra.mxu0 %v920
    %922 = vmatprep.subr.mxu0 0.0
    %v923 = vand.u32 %v73, 4294901760
    %v924 = vsub.f32 %v73, %v923
    %v925 = vand.u32 %v924, 4294901760
    %926 = vmatpush1.msra.mxu0 %v925
    %927 = vmatprep.subr.mxu0 0.0
    %v928 = vand.u32 %v74, 4294901760
    %v929 = vsub.f32 %v74, %v928
    %v930 = vand.u32 %v929, 4294901760
    %931 = vmatpush1.msra.mxu0 %v930
    %932 = vmatprep.subr.mxu0 0.0
    %v933 = vand.u32 %v75, 4294901760
    %v934 = vsub.f32 %v75, %v933
    %v935 = vand.u32 %v934, 4294901760
    %936 = vmatpush1.msra.mxu0 %v935
    %937 = vmatprep.subr.mxu0 0.0
    %v938 = vand.u32 %v76, 4294901760
    %v939 = vsub.f32 %v76, %v938
    %v940 = vand.u32 %v939, 4294901760
    %941 = vmatpush1.msra.mxu0 %v940
    %942 = vmatprep.subr.mxu0 0.0
    %v943 = vand.u32 %v77, 4294901760
    %v944 = vsub.f32 %v77, %v943
    %v945 = vand.u32 %v944, 4294901760
    %946 = vmatpush1.msra.mxu0 %v945
    %947 = vmatprep.subr.mxu0 0.0
    %v948 = vand.u32 %v78, 4294901760
    %v949 = vsub.f32 %v78, %v948
    %v950 = vand.u32 %v949, 4294901760
    %951 = vmatpush1.msra.mxu0 %v950
    %952 = vmatprep.subr.mxu0 0.0
    %v953 = vand.u32 %v79, 4294901760
    %v954 = vsub.f32 %v79, %v953
    %v955 = vand.u32 %v954, 4294901760
    %956 = vmatpush1.msra.mxu0 %v955
    %957 = vmatprep.subr.mxu0 0.0
    %v958 = vand.u32 %v80, 4294901760
    %v959 = vsub.f32 %v80, %v958
    %v960 = vand.u32 %v959, 4294901760
    %961 = vmatpush1.msra.mxu0 %v960
    %962 = vmatprep.subr.mxu0 0.0
    %v963 = vand.u32 %v81, 4294901760
    %v964 = vsub.f32 %v81, %v963
    %v965 = vand.u32 %v964, 4294901760
    %966 = vmatpush1.msra.mxu0 %v965
    %967 = vmatprep.subr.mxu0 0.0
    %v968 = vand.u32 %v82, 4294901760
    %v969 = vsub.f32 %v82, %v968
    %v970 = vand.u32 %v969, 4294901760
    %971 = vmatpush1.msra.mxu0 %v970
    %v972 = vand.u32 %v195, 4294901760
    %973 = vmatprep.mubr.f32.mxu0 %v972
    %v974 = vand.u32 %v194, 4294901760
    %975 = vmatmul.mubr.f32.gmra.mrb[0].mxu0 %v974
    %v976 = vpop.f32.mrb[0].mxu0
    %v977 = vadd.f32 %v809, %v976
    %v978 = vpop.f32.mrb[0].mxu0
    %979 = vdwg.mxu0
    %980 = vmatprep.subr.mxu0 0.0
    %v981 = vand.u32 %v51, 4294901760
    %982 = vmatpush1.msra.mxu0 %v981
    %983 = vmatprep.subr.mxu0 0.0
    %v984 = vand.u32 %v52, 4294901760
    %985 = vmatpush1.msra.mxu0 %v984
    %986 = vmatprep.subr.mxu0 0.0
    %v987 = vand.u32 %v53, 4294901760
    %988 = vmatpush1.msra.mxu0 %v987
    %989 = vmatprep.subr.mxu0 0.0
    %v990 = vand.u32 %v54, 4294901760
    %991 = vmatpush1.msra.mxu0 %v990
    %992 = vmatprep.subr.mxu0 0.0
    %v993 = vand.u32 %v55, 4294901760
    %994 = vmatpush1.msra.mxu0 %v993
    %995 = vmatprep.subr.mxu0 0.0
    %v996 = vand.u32 %v56, 4294901760
    %997 = vmatpush1.msra.mxu0 %v996
    %998 = vmatprep.subr.mxu0 0.0
    %v999 = vand.u32 %v57, 4294901760
    %1000 = vmatpush1.msra.mxu0 %v999
    %1001 = vmatprep.subr.mxu0 0.0
    %v1002 = vand.u32 %v58, 4294901760
    %1003 = vmatpush1.msra.mxu0 %v1002
    %1004 = vmatprep.subr.mxu0 0.0
    %v1005 = vand.u32 %v59, 4294901760
    %1006 = vmatpush1.msra.mxu0 %v1005
    %1007 = vmatprep.subr.mxu0 0.0
    %v1008 = vand.u32 %v60, 4294901760
    %1009 = vmatpush1.msra.mxu0 %v1008
    %1010 = vmatprep.subr.mxu0 0.0
    %v1011 = vand.u32 %v61, 4294901760
    %1012 = vmatpush1.msra.mxu0 %v1011
    %1013 = vmatprep.subr.mxu0 0.0
    %v1014 = vand.u32 %v62, 4294901760
    %1015 = vmatpush1.msra.mxu0 %v1014
    %1016 = vmatprep.subr.mxu0 0.0
    %v1017 = vand.u32 %v63, 4294901760
    %1018 = vmatpush1.msra.mxu0 %v1017
    %1019 = vmatprep.subr.mxu0 0.0
    %v1020 = vand.u32 %v64, 4294901760
    %1021 = vmatpush1.msra.mxu0 %v1020
    %1022 = vmatprep.subr.mxu0 0.0
    %v1023 = vand.u32 %v65, 4294901760
    %1024 = vmatpush1.msra.mxu0 %v1023
    %1025 = vmatprep.subr.mxu0 0.0
    %v1026 = vand.u32 %v66, 4294901760
    %1027 = vmatpush1.msra.mxu0 %v1026
    %1028 = vmatprep.subr.mxu0 0.0
    %v1029 = vand.u32 %v67, 4294901760
    %1030 = vmatpush1.msra.mxu0 %v1029
    %1031 = vmatprep.subr.mxu0 0.0
    %v1032 = vand.u32 %v68, 4294901760
    %1033 = vmatpush1.msra.mxu0 %v1032
    %1034 = vmatprep.subr.mxu0 0.0
    %v1035 = vand.u32 %v69, 4294901760
    %1036 = vmatpush1.msra.mxu0 %v1035
    %1037 = vmatprep.subr.mxu0 0.0
    %v1038 = vand.u32 %v70, 4294901760
    %1039 = vmatpush1.msra.mxu0 %v1038
    %1040 = vmatprep.subr.mxu0 0.0
    %v1041 = vand.u32 %v71, 4294901760
    %1042 = vmatpush1.msra.mxu0 %v1041
    %1043 = vmatprep.subr.mxu0 0.0
    %v1044 = vand.u32 %v72, 4294901760
    %1045 = vmatpush1.msra.mxu0 %v1044
    %1046 = vmatprep.subr.mxu0 0.0
    %v1047 = vand.u32 %v73, 4294901760
    %1048 = vmatpush1.msra.mxu0 %v1047
    %1049 = vmatprep.subr.mxu0 0.0
    %v1050 = vand.u32 %v74, 4294901760
    %1051 = vmatpush1.msra.mxu0 %v1050
    %1052 = vmatprep.subr.mxu0 0.0
    %v1053 = vand.u32 %v75, 4294901760
    %1054 = vmatpush1.msra.mxu0 %v1053
    %1055 = vmatprep.subr.mxu0 0.0
    %v1056 = vand.u32 %v76, 4294901760
    %1057 = vmatpush1.msra.mxu0 %v1056
    %1058 = vmatprep.subr.mxu0 0.0
    %v1059 = vand.u32 %v77, 4294901760
    %1060 = vmatpush1.msra.mxu0 %v1059
    %1061 = vmatprep.subr.mxu0 0.0
    %v1062 = vand.u32 %v78, 4294901760
    %1063 = vmatpush1.msra.mxu0 %v1062
    %1064 = vmatprep.subr.mxu0 0.0
    %v1065 = vand.u32 %v79, 4294901760
    %1066 = vmatpush1.msra.mxu0 %v1065
    %1067 = vmatprep.subr.mxu0 0.0
    %v1068 = vand.u32 %v80, 4294901760
    %1069 = vmatpush1.msra.mxu0 %v1068
    %1070 = vmatprep.subr.mxu0 0.0
    %v1071 = vand.u32 %v81, 4294901760
    %1072 = vmatpush1.msra.mxu0 %v1071
    %1073 = vmatprep.subr.mxu0 0.0
    %v1074 = vand.u32 %v82, 4294901760
    %1075 = vmatpush1.msra.mxu0 %v1074
    %v1076 = vand.u32 %v195, 4294901760
    %1077 = vmatprep.mubr.f32.mxu0 %v1076
    %v1078 = vand.u32 %v194, 4294901760
    %1079 = vmatmul.mubr.f32.gmra.mrb[0].mxu0 %v1078
    %v1080 = vpop.f32.mrb[0].mxu0
    %v1081 = vadd.f32 %v977, %v1080
    %v1082 = vpop.f32.mrb[0].mxu0
    %1083 = vdwg.mxu0
    %1084 = vmatprep.subr.mxu0 0.0
    %v1085 = vand.u32 %v83, 4294901760
    %1086 = vmatpush1.msra.mxu0 %v1085
    %1087 = vmatprep.subr.mxu0 0.0
    %v1088 = vand.u32 %v84, 4294901760
    %1089 = vmatpush1.msra.mxu0 %v1088
    %1090 = vmatprep.subr.mxu0 0.0
    %v1091 = vand.u32 %v85, 4294901760
    %1092 = vmatpush1.msra.mxu0 %v1091
    %1093 = vmatprep.subr.mxu0 0.0
    %v1094 = vand.u32 %v86, 4294901760
    %1095 = vmatpush1.msra.mxu0 %v1094
    %1096 = vmatprep.subr.mxu0 0.0
    %v1097 = vand.u32 %v87, 4294901760
    %1098 = vmatpush1.msra.mxu0 %v1097
    %1099 = vmatprep.subr.mxu0 0.0
    %v1100 = vand.u32 %v88, 4294901760
    %1101 = vmatpush1.msra.mxu0 %v1100
    %1102 = vmatprep.subr.mxu0 0.0
    %v1103 = vand.u32 %v89, 4294901760
    %1104 = vmatpush1.msra.mxu0 %v1103
    %1105 = vmatprep.subr.mxu0 0.0
    %v1106 = vand.u32 %v90, 4294901760
    %1107 = vmatpush1.msra.mxu0 %v1106
    %1108 = vmatprep.subr.mxu0 0.0
    %v1109 = vand.u32 %v91, 4294901760
    %1110 = vmatpush1.msra.mxu0 %v1109
    %1111 = vmatprep.subr.mxu0 0.0
    %v1112 = vand.u32 %v92, 4294901760
    %1113 = vmatpush1.msra.mxu0 %v1112
    %1114 = vmatprep.subr.mxu0 0.0
    %v1115 = vand.u32 %v93, 4294901760
    %1116 = vmatpush1.msra.mxu0 %v1115
    %1117 = vmatprep.subr.mxu0 0.0
    %v1118 = vand.u32 %v94, 4294901760
    %1119 = vmatpush1.msra.mxu0 %v1118
    %1120 = vmatprep.subr.mxu0 0.0
    %v1121 = vand.u32 %v95, 4294901760
    %1122 = vmatpush1.msra.mxu0 %v1121
    %1123 = vmatprep.subr.mxu0 0.0
    %v1124 = vand.u32 %v96, 4294901760
    %1125 = vmatpush1.msra.mxu0 %v1124
    %1126 = vmatprep.subr.mxu0 0.0
    %v1127 = vand.u32 %v97, 4294901760
    %1128 = vmatpush1.msra.mxu0 %v1127
    %1129 = vmatprep.subr.mxu0 0.0
    %v1130 = vand.u32 %v98, 4294901760
    %1131 = vmatpush1.msra.mxu0 %v1130
    %1132 = vmatprep.subr.mxu0 0.0
    %v1133 = vand.u32 %v99, 4294901760
    %1134 = vmatpush1.msra.mxu0 %v1133
    %1135 = vmatprep.subr.mxu0 0.0
    %v1136 = vand.u32 %v100, 4294901760
    %1137 = vmatpush1.msra.mxu0 %v1136
    %1138 = vmatprep.subr.mxu0 0.0
    %v1139 = vand.u32 %v101, 4294901760
    %1140 = vmatpush1.msra.mxu0 %v1139
    %1141 = vmatprep.subr.mxu0 0.0
    %v1142 = vand.u32 %v102, 4294901760
    %1143 = vmatpush1.msra.mxu0 %v1142
    %1144 = vmatprep.subr.mxu0 0.0
    %v1145 = vand.u32 %v103, 4294901760
    %1146 = vmatpush1.msra.mxu0 %v1145
    %1147 = vmatprep.subr.mxu0 0.0
    %v1148 = vand.u32 %v104, 4294901760
    %1149 = vmatpush1.msra.mxu0 %v1148
    %1150 = vmatprep.subr.mxu0 0.0
    %v1151 = vand.u32 %v105, 4294901760
    %1152 = vmatpush1.msra.mxu0 %v1151
    %1153 = vmatprep.subr.mxu0 0.0
    %v1154 = vand.u32 %v106, 4294901760
    %1155 = vmatpush1.msra.mxu0 %v1154
    %1156 = vmatprep.subr.mxu0 0.0
    %v1157 = vand.u32 %v107, 4294901760
    %1158 = vmatpush1.msra.mxu0 %v1157
    %1159 = vmatprep.subr.mxu0 0.0
    %v1160 = vand.u32 %v108, 4294901760
    %1161 = vmatpush1.msra.mxu0 %v1160
    %1162 = vmatprep.subr.mxu0 0.0
    %v1163 = vand.u32 %v109, 4294901760
    %1164 = vmatpush1.msra.mxu0 %v1163
    %1165 = vmatprep.subr.mxu0 0.0
    %v1166 = vand.u32 %v110, 4294901760
    %1167 = vmatpush1.msra.mxu0 %v1166
    %1168 = vmatprep.subr.mxu0 0.0
    %v1169 = vand.u32 %v111, 4294901760
    %1170 = vmatpush1.msra.mxu0 %v1169
    %1171 = vmatprep.subr.mxu0 0.0
    %v1172 = vand.u32 %v112, 4294901760
    %1173 = vmatpush1.msra.mxu0 %v1172
    %1174 = vmatprep.subr.mxu0 0.0
    %v1175 = vand.u32 %v113, 4294901760
    %1176 = vmatpush1.msra.mxu0 %v1175
    %1177 = vmatprep.subr.mxu0 0.0
    %v1178 = vand.u32 %v114, 4294901760
    %1179 = vmatpush1.msra.mxu0 %v1178
    %v1180 = vand.u32 %v197, 4294901760
    %v1181 = vsub.f32 %v197, %v1180
    %v1182 = vand.u32 %v1181, 4294901760
    %v1183 = vsub.f32 %v1181, %v1182
    %v1184 = vand.u32 %v1183, 4294901760
    %1185 = vmatprep.mubr.f32.mxu0 %v1184
    %v1186 = vand.u32 %v196, 4294901760
    %v1187 = vsub.f32 %v196, %v1186
    %v1188 = vand.u32 %v1187, 4294901760
    %v1189 = vsub.f32 %v1187, %v1188
    %v1190 = vand.u32 %v1189, 4294901760
    %1191 = vmatmul.mubr.f32.gmra.mrb[0].mxu0 %v1190
    %v1192 = vpop.f32.mrb[0].mxu0
    %v1193 = vadd.f32 %v1081, %v1192
    %v1194 = vpop.f32.mrb[0].mxu0
    %1195 = vdwg.mxu0
    %1196 = vmatprep.subr.mxu0 0.0
    %v1197 = vand.u32 %v83, 4294901760
    %v1198 = vsub.f32 %v83, %v1197
    %v1199 = vand.u32 %v1198, 4294901760
    %v1200 = vsub.f32 %v1198, %v1199
    %v1201 = vand.u32 %v1200, 4294901760
    %1202 = vmatpush1.msra.mxu0 %v1201
    %1203 = vmatprep.subr.mxu0 0.0
    %v1204 = vand.u32 %v84, 4294901760
    %v1205 = vsub.f32 %v84, %v1204
    %v1206 = vand.u32 %v1205, 4294901760
    %v1207 = vsub.f32 %v1205, %v1206
    %v1208 = vand.u32 %v1207, 4294901760
    %1209 = vmatpush1.msra.mxu0 %v1208
    %1210 = vmatprep.subr.mxu0 0.0
    %v1211 = vand.u32 %v85, 4294901760
    %v1212 = vsub.f32 %v85, %v1211
    %v1213 = vand.u32 %v1212, 4294901760
    %v1214 = vsub.f32 %v1212, %v1213
    %v1215 = vand.u32 %v1214, 4294901760
    %1216 = vmatpush1.msra.mxu0 %v1215
    %1217 = vmatprep.subr.mxu0 0.0
    %v1218 = vand.u32 %v86, 4294901760
    %v1219 = vsub.f32 %v86, %v1218
    %v1220 = vand.u32 %v1219, 4294901760
    %v1221 = vsub.f32 %v1219, %v1220
    %v1222 = vand.u32 %v1221, 4294901760
    %1223 = vmatpush1.msra.mxu0 %v1222
    %1224 = vmatprep.subr.mxu0 0.0
    %v1225 = vand.u32 %v87, 4294901760
    %v1226 = vsub.f32 %v87, %v1225
    %v1227 = vand.u32 %v1226, 4294901760
    %v1228 = vsub.f32 %v1226, %v1227
    %v1229 = vand.u32 %v1228, 4294901760
    %1230 = vmatpush1.msra.mxu0 %v1229
    %1231 = vmatprep.subr.mxu0 0.0
    %v1232 = vand.u32 %v88, 4294901760
    %v1233 = vsub.f32 %v88, %v1232
    %v1234 = vand.u32 %v1233, 4294901760
    %v1235 = vsub.f32 %v1233, %v1234
    %v1236 = vand.u32 %v1235, 4294901760
    %1237 = vmatpush1.msra.mxu0 %v1236
    %1238 = vmatprep.subr.mxu0 0.0
    %v1239 = vand.u32 %v89, 4294901760
    %v1240 = vsub.f32 %v89, %v1239
    %v1241 = vand.u32 %v1240, 4294901760
    %v1242 = vsub.f32 %v1240, %v1241
    %v1243 = vand.u32 %v1242, 4294901760
    %1244 = vmatpush1.msra.mxu0 %v1243
    %1245 = vmatprep.subr.mxu0 0.0
    %v1246 = vand.u32 %v90, 4294901760
    %v1247 = vsub.f32 %v90, %v1246
    %v1248 = vand.u32 %v1247, 4294901760
    %v1249 = vsub.f32 %v1247, %v1248
    %v1250 = vand.u32 %v1249, 4294901760
    %1251 = vmatpush1.msra.mxu0 %v1250
    %1252 = vmatprep.subr.mxu0 0.0
    %v1253 = vand.u32 %v91, 4294901760
    %v1254 = vsub.f32 %v91, %v1253
    %v1255 = vand.u32 %v1254, 4294901760
    %v1256 = vsub.f32 %v1254, %v1255
    %v1257 = vand.u32 %v1256, 4294901760
    %1258 = vmatpush1.msra.mxu0 %v1257
    %1259 = vmatprep.subr.mxu0 0.0
    %v1260 = vand.u32 %v92, 4294901760
    %v1261 = vsub.f32 %v92, %v1260
    %v1262 = vand.u32 %v1261, 4294901760
    %v1263 = vsub.f32 %v1261, %v1262
    %v1264 = vand.u32 %v1263, 4294901760
    %1265 = vmatpush1.msra.mxu0 %v1264
    %1266 = vmatprep.subr.mxu0 0.0
    %v1267 = vand.u32 %v93, 4294901760
    %v1268 = vsub.f32 %v93, %v1267
    %v1269 = vand.u32 %v1268, 4294901760
    %v1270 = vsub.f32 %v1268, %v1269
    %v1271 = vand.u32 %v1270, 4294901760
    %1272 = vmatpush1.msra.mxu0 %v1271
    %1273 = vmatprep.subr.mxu0 0.0
    %v1274 = vand.u32 %v94, 4294901760
    %v1275 = vsub.f32 %v94, %v1274
    %v1276 = vand.u32 %v1275, 4294901760
    %v1277 = vsub.f32 %v1275, %v1276
    %v1278 = vand.u32 %v1277, 4294901760
    %1279 = vmatpush1.msra.mxu0 %v1278
    %1280 = vmatprep.subr.mxu0 0.0
    %v1281 = vand.u32 %v95, 4294901760
    %v1282 = vsub.f32 %v95, %v1281
    %v1283 = vand.u32 %v1282, 4294901760
    %v1284 = vsub.f32 %v1282, %v1283
    %v1285 = vand.u32 %v1284, 4294901760
    %1286 = vmatpush1.msra.mxu0 %v1285
    %1287 = vmatprep.subr.mxu0 0.0
    %v1288 = vand.u32 %v96, 4294901760
    %v1289 = vsub.f32 %v96, %v1288
    %v1290 = vand.u32 %v1289, 4294901760
    %v1291 = vsub.f32 %v1289, %v1290
    %v1292 = vand.u32 %v1291, 4294901760
    %1293 = vmatpush1.msra.mxu0 %v1292
    %1294 = vmatprep.subr.mxu0 0.0
    %v1295 = vand.u32 %v97, 4294901760
    %v1296 = vsub.f32 %v97, %v1295
    %v1297 = vand.u32 %v1296, 4294901760
    %v1298 = vsub.f32 %v1296, %v1297
    %v1299 = vand.u32 %v1298, 4294901760
    %1300 = vmatpush1.msra.mxu0 %v1299
    %1301 = vmatprep.subr.mxu0 0.0
    %v1302 = vand.u32 %v98, 4294901760
    %v1303 = vsub.f32 %v98, %v1302
    %v1304 = vand.u32 %v1303, 4294901760
    %v1305 = vsub.f32 %v1303, %v1304
    %v1306 = vand.u32 %v1305, 4294901760
    %1307 = vmatpush1.msra.mxu0 %v1306
    %1308 = vmatprep.subr.mxu0 0.0
    %v1309 = vand.u32 %v99, 4294901760
    %v1310 = vsub.f32 %v99, %v1309
    %v1311 = vand.u32 %v1310, 4294901760
    %v1312 = vsub.f32 %v1310, %v1311
    %v1313 = vand.u32 %v1312, 4294901760
    %1314 = vmatpush1.msra.mxu0 %v1313
    %1315 = vmatprep.subr.mxu0 0.0
    %v1316 = vand.u32 %v100, 4294901760
    %v1317 = vsub.f32 %v100, %v1316
    %v1318 = vand.u32 %v1317, 4294901760
    %v1319 = vsub.f32 %v1317, %v1318
    %v1320 = vand.u32 %v1319, 4294901760
    %1321 = vmatpush1.msra.mxu0 %v1320
    %1322 = vmatprep.subr.mxu0 0.0
    %v1323 = vand.u32 %v101, 4294901760
    %v1324 = vsub.f32 %v101, %v1323
    %v1325 = vand.u32 %v1324, 4294901760
    %v1326 = vsub.f32 %v1324, %v1325
    %v1327 = vand.u32 %v1326, 4294901760
    %1328 = vmatpush1.msra.mxu0 %v1327
    %1329 = vmatprep.subr.mxu0 0.0
    %v1330 = vand.u32 %v102, 4294901760
    %v1331 = vsub.f32 %v102, %v1330
    %v1332 = vand.u32 %v1331, 4294901760
    %v1333 = vsub.f32 %v1331, %v1332
    %v1334 = vand.u32 %v1333, 4294901760
    %1335 = vmatpush1.msra.mxu0 %v1334
    %1336 = vmatprep.subr.mxu0 0.0
    %v1337 = vand.u32 %v103, 4294901760
    %v1338 = vsub.f32 %v103, %v1337
    %v1339 = vand.u32 %v1338, 4294901760
    %v1340 = vsub.f32 %v1338, %v1339
    %v1341 = vand.u32 %v1340, 4294901760
    %1342 = vmatpush1.msra.mxu0 %v1341
    %1343 = vmatprep.subr.mxu0 0.0
    %v1344 = vand.u32 %v104, 4294901760
    %v1345 = vsub.f32 %v104, %v1344
    %v1346 = vand.u32 %v1345, 4294901760
    %v1347 = vsub.f32 %v1345, %v1346
    %v1348 = vand.u32 %v1347, 4294901760
    %1349 = vmatpush1.msra.mxu0 %v1348
    %1350 = vmatprep.subr.mxu0 0.0
    %v1351 = vand.u32 %v105, 4294901760
    %v1352 = vsub.f32 %v105, %v1351
    %v1353 = vand.u32 %v1352, 4294901760
    %v1354 = vsub.f32 %v1352, %v1353
    %v1355 = vand.u32 %v1354, 4294901760
    %1356 = vmatpush1.msra.mxu0 %v1355
    %1357 = vmatprep.subr.mxu0 0.0
    %v1358 = vand.u32 %v106, 4294901760
    %v1359 = vsub.f32 %v106, %v1358
    %v1360 = vand.u32 %v1359, 4294901760
    %v1361 = vsub.f32 %v1359, %v1360
    %v1362 = vand.u32 %v1361, 4294901760
    %1363 = vmatpush1.msra.mxu0 %v1362
    %1364 = vmatprep.subr.mxu0 0.0
    %v1365 = vand.u32 %v107, 4294901760
    %v1366 = vsub.f32 %v107, %v1365
    %v1367 = vand.u32 %v1366, 4294901760
    %v1368 = vsub.f32 %v1366, %v1367
    %v1369 = vand.u32 %v1368, 4294901760
    %1370 = vmatpush1.msra.mxu0 %v1369
    %1371 = vmatprep.subr.mxu0 0.0
    %v1372 = vand.u32 %v108, 4294901760
    %v1373 = vsub.f32 %v108, %v1372
    %v1374 = vand.u32 %v1373, 4294901760
    %v1375 = vsub.f32 %v1373, %v1374
    %v1376 = vand.u32 %v1375, 4294901760
    %1377 = vmatpush1.msra.mxu0 %v1376
    %1378 = vmatprep.subr.mxu0 0.0
    %v1379 = vand.u32 %v109, 4294901760
    %v1380 = vsub.f32 %v109, %v1379
    %v1381 = vand.u32 %v1380, 4294901760
    %v1382 = vsub.f32 %v1380, %v1381
    %v1383 = vand.u32 %v1382, 4294901760
    %1384 = vmatpush1.msra.mxu0 %v1383
    %1385 = vmatprep.subr.mxu0 0.0
    %v1386 = vand.u32 %v110, 4294901760
    %v1387 = vsub.f32 %v110, %v1386
    %v1388 = vand.u32 %v1387, 4294901760
    %v1389 = vsub.f32 %v1387, %v1388
    %v1390 = vand.u32 %v1389, 4294901760
    %1391 = vmatpush1.msra.mxu0 %v1390
    %1392 = vmatprep.subr.mxu0 0.0
    %v1393 = vand.u32 %v111, 4294901760
    %v1394 = vsub.f32 %v111, %v1393
    %v1395 = vand.u32 %v1394, 4294901760
    %v1396 = vsub.f32 %v1394, %v1395
    %v1397 = vand.u32 %v1396, 4294901760
    %1398 = vmatpush1.msra.mxu0 %v1397
    %1399 = vmatprep.subr.mxu0 0.0
    %v1400 = vand.u32 %v112, 4294901760
    %v1401 = vsub.f32 %v112, %v1400
    %v1402 = vand.u32 %v1401, 4294901760
    %v1403 = vsub.f32 %v1401, %v1402
    %v1404 = vand.u32 %v1403, 4294901760
    %1405 = vmatpush1.msra.mxu0 %v1404
    %1406 = vmatprep.subr.mxu0 0.0
    %v1407 = vand.u32 %v113, 4294901760
    %v1408 = vsub.f32 %v113, %v1407
    %v1409 = vand.u32 %v1408, 4294901760
    %v1410 = vsub.f32 %v1408, %v1409
    %v1411 = vand.u32 %v1410, 4294901760
    %1412 = vmatpush1.msra.mxu0 %v1411
    %1413 = vmatprep.subr.mxu0 0.0
    %v1414 = vand.u32 %v114, 4294901760
    %v1415 = vsub.f32 %v114, %v1414
    %v1416 = vand.u32 %v1415, 4294901760
    %v1417 = vsub.f32 %v1415, %v1416
    %v1418 = vand.u32 %v1417, 4294901760
    %1419 = vmatpush1.msra.mxu0 %v1418
    %v1420 = vand.u32 %v197, 4294901760
    %1421 = vmatprep.mubr.f32.mxu0 %v1420
    %v1422 = vand.u32 %v196, 4294901760
    %1423 = vmatmul.mubr.f32.gmra.mrb[0].mxu0 %v1422
    %v1424 = vpop.f32.mrb[0].mxu0
    %v1425 = vadd.f32 %v1193, %v1424
    %v1426 = vpop.f32.mrb[0].mxu0
    %1427 = vdwg.mxu0
    %1428 = vmatprep.subr.mxu0 0.0
    %v1429 = vand.u32 %v83, 4294901760
    %v1430 = vsub.f32 %v83, %v1429
    %1431 = vmatpush1.msra.mxu0 %v1430
    %1432 = vmatprep.subr.mxu0 0.0
    %v1433 = vand.u32 %v84, 4294901760
    %v1434 = vsub.f32 %v84, %v1433
    %1435 = vmatpush1.msra.mxu0 %v1434
    %1436 = vmatprep.subr.mxu0 0.0
    %v1437 = vand.u32 %v85, 4294901760
    %v1438 = vsub.f32 %v85, %v1437
    %1439 = vmatpush1.msra.mxu0 %v1438
    %1440 = vmatprep.subr.mxu0 0.0
    %v1441 = vand.u32 %v86, 4294901760
    %v1442 = vsub.f32 %v86, %v1441
    %1443 = vmatpush1.msra.mxu0 %v1442
    %1444 = vmatprep.subr.mxu0 0.0
    %v1445 = vand.u32 %v87, 4294901760
    %v1446 = vsub.f32 %v87, %v1445
    %1447 = vmatpush1.msra.mxu0 %v1446
    %1448 = vmatprep.subr.mxu0 0.0
    %v1449 = vand.u32 %v88, 4294901760
    %v1450 = vsub.f32 %v88, %v1449
    %1451 = vmatpush1.msra.mxu0 %v1450
    %1452 = vmatprep.subr.mxu0 0.0
    %v1453 = vand.u32 %v89, 4294901760
    %v1454 = vsub.f32 %v89, %v1453
    %1455 = vmatpush1.msra.mxu0 %v1454
    %1456 = vmatprep.subr.mxu0 0.0
    %v1457 = vand.u32 %v90, 4294901760
    %v1458 = vsub.f32 %v90, %v1457
    %1459 = vmatpush1.msra.mxu0 %v1458
    %1460 = vmatprep.subr.mxu0 0.0
    %v1461 = vand.u32 %v91, 4294901760
    %v1462 = vsub.f32 %v91, %v1461
    %1463 = vmatpush1.msra.mxu0 %v1462
    %1464 = vmatprep.subr.mxu0 0.0
    %v1465 = vand.u32 %v92, 4294901760
    %v1466 = vsub.f32 %v92, %v1465
    %1467 = vmatpush1.msra.mxu0 %v1466
    %1468 = vmatprep.subr.mxu0 0.0
    %v1469 = vand.u32 %v93, 4294901760
    %v1470 = vsub.f32 %v93, %v1469
    %1471 = vmatpush1.msra.mxu0 %v1470
    %1472 = vmatprep.subr.mxu0 0.0
    %v1473 = vand.u32 %v94, 4294901760
    %v1474 = vsub.f32 %v94, %v1473
    %1475 = vmatpush1.msra.mxu0 %v1474
    %1476 = vmatprep.subr.mxu0 0.0
    %v1477 = vand.u32 %v95, 4294901760
    %v1478 = vsub.f32 %v95, %v1477
    %1479 = vmatpush1.msra.mxu0 %v1478
    %1480 = vmatprep.subr.mxu0 0.0
    %v1481 = vand.u32 %v96, 4294901760
    %v1482 = vsub.f32 %v96, %v1481
    %1483 = vmatpush1.msra.mxu0 %v1482
    %1484 = vmatprep.subr.mxu0 0.0
    %v1485 = vand.u32 %v97, 4294901760
    %v1486 = vsub.f32 %v97, %v1485
    %1487 = vmatpush1.msra.mxu0 %v1486
    %1488 = vmatprep.subr.mxu0 0.0
    %v1489 = vand.u32 %v98, 4294901760
    %v1490 = vsub.f32 %v98, %v1489
    %1491 = vmatpush1.msra.mxu0 %v1490
    %1492 = vmatprep.subr.mxu0 0.0
    %v1493 = vand.u32 %v99, 4294901760
    %v1494 = vsub.f32 %v99, %v1493
    %1495 = vmatpush1.msra.mxu0 %v1494
    %1496 = vmatprep.subr.mxu0 0.0
    %v1497 = vand.u32 %v100, 4294901760
    %v1498 = vsub.f32 %v100, %v1497
    %1499 = vmatpush1.msra.mxu0 %v1498
    %1500 = vmatprep.subr.mxu0 0.0
    %v1501 = vand.u32 %v101, 4294901760
    %v1502 = vsub.f32 %v101, %v1501
    %1503 = vmatpush1.msra.mxu0 %v1502
    %1504 = vmatprep.subr.mxu0 0.0
    %v1505 = vand.u32 %v102, 4294901760
    %v1506 = vsub.f32 %v102, %v1505
    %1507 = vmatpush1.msra.mxu0 %v1506
    %1508 = vmatprep.subr.mxu0 0.0
    %v1509 = vand.u32 %v103, 4294901760
    %v1510 = vsub.f32 %v103, %v1509
    %1511 = vmatpush1.msra.mxu0 %v1510
    %1512 = vmatprep.subr.mxu0 0.0
    %v1513 = vand.u32 %v104, 4294901760
    %v1514 = vsub.f32 %v104, %v1513
    %1515 = vmatpush1.msra.mxu0 %v1514
    %1516 = vmatprep.subr.mxu0 0.0
    %v1517 = vand.u32 %v105, 4294901760
    %v1518 = vsub.f32 %v105, %v1517
    %1519 = vmatpush1.msra.mxu0 %v1518
    %1520 = vmatprep.subr.mxu0 0.0
    %v1521 = vand.u32 %v106, 4294901760
    %v1522 = vsub.f32 %v106, %v1521
    %1523 = vmatpush1.msra.mxu0 %v1522
    %1524 = vmatprep.subr.mxu0 0.0
    %v1525 = vand.u32 %v107, 4294901760
    %v1526 = vsub.f32 %v107, %v1525
    %1527 = vmatpush1.msra.mxu0 %v1526
    %1528 = vmatprep.subr.mxu0 0.0
    %v1529 = vand.u32 %v108, 4294901760
    %v1530 = vsub.f32 %v108, %v1529
    %1531 = vmatpush1.msra.mxu0 %v1530
    %1532 = vmatprep.subr.mxu0 0.0
    %v1533 = vand.u32 %v109, 4294901760
    %v1534 = vsub.f32 %v109, %v1533
    %1535 = vmatpush1.msra.mxu0 %v1534
    %1536 = vmatprep.subr.mxu0 0.0
    %v1537 = vand.u32 %v110, 4294901760
    %v1538 = vsub.f32 %v110, %v1537
    %1539 = vmatpush1.msra.mxu0 %v1538
    %1540 = vmatprep.subr.mxu0 0.0
    %v1541 = vand.u32 %v111, 4294901760
    %v1542 = vsub.f32 %v111, %v1541
    %1543 = vmatpush1.msra.mxu0 %v1542
    %1544 = vmatprep.subr.mxu0 0.0
    %v1545 = vand.u32 %v112, 4294901760
    %v1546 = vsub.f32 %v112, %v1545
    %1547 = vmatpush1.msra.mxu0 %v1546
    %1548 = vmatprep.subr.mxu0 0.0
    %v1549 = vand.u32 %v113, 4294901760
    %v1550 = vsub.f32 %v113, %v1549
    %1551 = vmatpush1.msra.mxu0 %v1550
    %1552 = vmatprep.subr.mxu0 0.0
    %v1553 = vand.u32 %v114, 4294901760
    %v1554 = vsub.f32 %v114, %v1553
    %1555 = vmatpush1.msra.mxu0 %v1554
    %v1556 = vand.u32 %v197, 4294901760
    %v1557 = vsub.f32 %v197, %v1556
    %1558 = vmatprep.mubr.f32.mxu0 %v1557
    %v1559 = vand.u32 %v196, 4294901760
    %v1560 = vsub.f32 %v196, %v1559
    %1561 = vmatmul.mubr.f32.gmra.mrb[0].mxu0 %v1560
    %v1562 = vpop.f32.mrb[0].mxu0
    %v1563 = vadd.f32 %v1425, %v1562
    %v1564 = vpop.f32.mrb[0].mxu0
    %1565 = vdwg.mxu0
    %1566 = vmatprep.subr.mxu0 0.0
    %v1567 = vand.u32 %v83, 4294901760
    %1568 = vmatpush1.msra.mxu0 %v1567
    %1569 = vmatprep.subr.mxu0 0.0
    %v1570 = vand.u32 %v84, 4294901760
    %1571 = vmatpush1.msra.mxu0 %v1570
    %1572 = vmatprep.subr.mxu0 0.0
    %v1573 = vand.u32 %v85, 4294901760
    %1574 = vmatpush1.msra.mxu0 %v1573
    %1575 = vmatprep.subr.mxu0 0.0
    %v1576 = vand.u32 %v86, 4294901760
    %1577 = vmatpush1.msra.mxu0 %v1576
    %1578 = vmatprep.subr.mxu0 0.0
    %v1579 = vand.u32 %v87, 4294901760
    %1580 = vmatpush1.msra.mxu0 %v1579
    %1581 = vmatprep.subr.mxu0 0.0
    %v1582 = vand.u32 %v88, 4294901760
    %1583 = vmatpush1.msra.mxu0 %v1582
    %1584 = vmatprep.subr.mxu0 0.0
    %v1585 = vand.u32 %v89, 4294901760
    %1586 = vmatpush1.msra.mxu0 %v1585
    %1587 = vmatprep.subr.mxu0 0.0
    %v1588 = vand.u32 %v90, 4294901760
    %1589 = vmatpush1.msra.mxu0 %v1588
    %1590 = vmatprep.subr.mxu0 0.0
    %v1591 = vand.u32 %v91, 4294901760
    %1592 = vmatpush1.msra.mxu0 %v1591
    %1593 = vmatprep.subr.mxu0 0.0
    %v1594 = vand.u32 %v92, 4294901760
    %1595 = vmatpush1.msra.mxu0 %v1594
    %1596 = vmatprep.subr.mxu0 0.0
    %v1597 = vand.u32 %v93, 4294901760
    %1598 = vmatpush1.msra.mxu0 %v1597
    %1599 = vmatprep.subr.mxu0 0.0
    %v1600 = vand.u32 %v94, 4294901760
    %1601 = vmatpush1.msra.mxu0 %v1600
    %1602 = vmatprep.subr.mxu0 0.0
    %v1603 = vand.u32 %v95, 4294901760
    %1604 = vmatpush1.msra.mxu0 %v1603
    %1605 = vmatprep.subr.mxu0 0.0
    %v1606 = vand.u32 %v96, 4294901760
    %1607 = vmatpush1.msra.mxu0 %v1606
    %1608 = vmatprep.subr.mxu0 0.0
    %v1609 = vand.u32 %v97, 4294901760
    %1610 = vmatpush1.msra.mxu0 %v1609
    %1611 = vmatprep.subr.mxu0 0.0
    %v1612 = vand.u32 %v98, 4294901760
    %1613 = vmatpush1.msra.mxu0 %v1612
    %1614 = vmatprep.subr.mxu0 0.0
    %v1615 = vand.u32 %v99, 4294901760
    %1616 = vmatpush1.msra.mxu0 %v1615
    %1617 = vmatprep.subr.mxu0 0.0
    %v1618 = vand.u32 %v100, 4294901760
    %1619 = vmatpush1.msra.mxu0 %v1618
    %1620 = vmatprep.subr.mxu0 0.0
    %v1621 = vand.u32 %v101, 4294901760
    %1622 = vmatpush1.msra.mxu0 %v1621
    %1623 = vmatprep.subr.mxu0 0.0
    %v1624 = vand.u32 %v102, 4294901760
    %1625 = vmatpush1.msra.mxu0 %v1624
    %1626 = vmatprep.subr.mxu0 0.0
    %v1627 = vand.u32 %v103, 4294901760
    %1628 = vmatpush1.msra.mxu0 %v1627
    %1629 = vmatprep.subr.mxu0 0.0
    %v1630 = vand.u32 %v104, 4294901760
    %1631 = vmatpush1.msra.mxu0 %v1630
    %1632 = vmatprep.subr.mxu0 0.0
    %v1633 = vand.u32 %v105, 4294901760
    %1634 = vmatpush1.msra.mxu0 %v1633
    %1635 = vmatprep.subr.mxu0 0.0
    %v1636 = vand.u32 %v106, 4294901760
    %1637 = vmatpush1.msra.mxu0 %v1636
    %1638 = vmatprep.subr.mxu0 0.0
    %v1639 = vand.u32 %v107, 4294901760
    %1640 = vmatpush1.msra.mxu0 %v1639
    %1641 = vmatprep.subr.mxu0 0.0
    %v1642 = vand.u32 %v108, 4294901760
    %1643 = vmatpush1.msra.mxu0 %v1642
    %1644 = vmatprep.subr.mxu0 0.0
    %v1645 = vand.u32 %v109, 4294901760
    %1646 = vmatpush1.msra.mxu0 %v1645
    %1647 = vmatprep.subr.mxu0 0.0
    %v1648 = vand.u32 %v110, 4294901760
    %1649 = vmatpush1.msra.mxu0 %v1648
    %1650 = vmatprep.subr.mxu0 0.0
    %v1651 = vand.u32 %v111, 4294901760
    %1652 = vmatpush1.msra.mxu0 %v1651
    %1653 = vmatprep.subr.mxu0 0.0
    %v1654 = vand.u32 %v112, 4294901760
    %1655 = vmatpush1.msra.mxu0 %v1654
    %1656 = vmatprep.subr.mxu0 0.0
    %v1657 = vand.u32 %v113, 4294901760
    %1658 = vmatpush1.msra.mxu0 %v1657
    %1659 = vmatprep.subr.mxu0 0.0
    %v1660 = vand.u32 %v114, 4294901760
    %1661 = vmatpush1.msra.mxu0 %v1660
    %v1662 = vand.u32 %v197, 4294901760
    %v1663 = vsub.f32 %v197, %v1662
    %v1664 = vand.u32 %v1663, 4294901760
    %1665 = vmatprep.mubr.f32.mxu0 %v1664
    %v1666 = vand.u32 %v196, 4294901760
    %v1667 = vsub.f32 %v196, %v1666
    %v1668 = vand.u32 %v1667, 4294901760
    %1669 = vmatmul.mubr.f32.gmra.mrb[0].mxu0 %v1668
    %v1670 = vpop.f32.mrb[0].mxu0
    %v1671 = vadd.f32 %v1563, %v1670
    %v1672 = vpop.f32.mrb[0].mxu0
    %1673 = vdwg.mxu0
    %1674 = vmatprep.subr.mxu0 0.0
    %v1675 = vand.u32 %v83, 4294901760
    %v1676 = vsub.f32 %v83, %v1675
    %v1677 = vand.u32 %v1676, 4294901760
    %1678 = vmatpush1.msra.mxu0 %v1677
    %1679 = vmatprep.subr.mxu0 0.0
    %v1680 = vand.u32 %v84, 4294901760
    %v1681 = vsub.f32 %v84, %v1680
    %v1682 = vand.u32 %v1681, 4294901760
    %1683 = vmatpush1.msra.mxu0 %v1682
    %1684 = vmatprep.subr.mxu0 0.0
    %v1685 = vand.u32 %v85, 4294901760
    %v1686 = vsub.f32 %v85, %v1685
    %v1687 = vand.u32 %v1686, 4294901760
    %1688 = vmatpush1.msra.mxu0 %v1687
    %1689 = vmatprep.subr.mxu0 0.0
    %v1690 = vand.u32 %v86, 4294901760
    %v1691 = vsub.f32 %v86, %v1690
    %v1692 = vand.u32 %v1691, 4294901760
    %1693 = vmatpush1.msra.mxu0 %v1692
    %1694 = vmatprep.subr.mxu0 0.0
    %v1695 = vand.u32 %v87, 4294901760
    %v1696 = vsub.f32 %v87, %v1695
    %v1697 = vand.u32 %v1696, 4294901760
    %1698 = vmatpush1.msra.mxu0 %v1697
    %1699 = vmatprep.subr.mxu0 0.0
    %v1700 = vand.u32 %v88, 4294901760
    %v1701 = vsub.f32 %v88, %v1700
    %v1702 = vand.u32 %v1701, 4294901760
    %1703 = vmatpush1.msra.mxu0 %v1702
    %1704 = vmatprep.subr.mxu0 0.0
    %v1705 = vand.u32 %v89, 4294901760
    %v1706 = vsub.f32 %v89, %v1705
    %v1707 = vand.u32 %v1706, 4294901760
    %1708 = vmatpush1.msra.mxu0 %v1707
    %1709 = vmatprep.subr.mxu0 0.0
    %v1710 = vand.u32 %v90, 4294901760
    %v1711 = vsub.f32 %v90, %v1710
    %v1712 = vand.u32 %v1711, 4294901760
    %1713 = vmatpush1.msra.mxu0 %v1712
    %1714 = vmatprep.subr.mxu0 0.0
    %v1715 = vand.u32 %v91, 4294901760
    %v1716 = vsub.f32 %v91, %v1715
    %v1717 = vand.u32 %v1716, 4294901760
    %1718 = vmatpush1.msra.mxu0 %v1717
    %1719 = vmatprep.subr.mxu0 0.0
    %v1720 = vand.u32 %v92, 4294901760
    %v1721 = vsub.f32 %v92, %v1720
    %v1722 = vand.u32 %v1721, 4294901760
    %1723 = vmatpush1.msra.mxu0 %v1722
    %1724 = vmatprep.subr.mxu0 0.0
    %v1725 = vand.u32 %v93, 4294901760
    %v1726 = vsub.f32 %v93, %v1725
    %v1727 = vand.u32 %v1726, 4294901760
    %1728 = vmatpush1.msra.mxu0 %v1727
    %1729 = vmatprep.subr.mxu0 0.0
    %v1730 = vand.u32 %v94, 4294901760
    %v1731 = vsub.f32 %v94, %v1730
    %v1732 = vand.u32 %v1731, 4294901760
    %1733 = vmatpush1.msra.mxu0 %v1732
    %1734 = vmatprep.subr.mxu0 0.0
    %v1735 = vand.u32 %v95, 4294901760
    %v1736 = vsub.f32 %v95, %v1735
    %v1737 = vand.u32 %v1736, 4294901760
    %1738 = vmatpush1.msra.mxu0 %v1737
    %1739 = vmatprep.subr.mxu0 0.0
    %v1740 = vand.u32 %v96, 4294901760
    %v1741 = vsub.f32 %v96, %v1740
    %v1742 = vand.u32 %v1741, 4294901760
    %1743 = vmatpush1.msra.mxu0 %v1742
    %1744 = vmatprep.subr.mxu0 0.0
    %v1745 = vand.u32 %v97, 4294901760
    %v1746 = vsub.f32 %v97, %v1745
    %v1747 = vand.u32 %v1746, 4294901760
    %1748 = vmatpush1.msra.mxu0 %v1747
    %1749 = vmatprep.subr.mxu0 0.0
    %v1750 = vand.u32 %v98, 4294901760
    %v1751 = vsub.f32 %v98, %v1750
    %v1752 = vand.u32 %v1751, 4294901760
    %1753 = vmatpush1.msra.mxu0 %v1752
    %1754 = vmatprep.subr.mxu0 0.0
    %v1755 = vand.u32 %v99, 4294901760
    %v1756 = vsub.f32 %v99, %v1755
    %v1757 = vand.u32 %v1756, 4294901760
    %1758 = vmatpush1.msra.mxu0 %v1757
    %1759 = vmatprep.subr.mxu0 0.0
    %v1760 = vand.u32 %v100, 4294901760
    %v1761 = vsub.f32 %v100, %v1760
    %v1762 = vand.u32 %v1761, 4294901760
    %1763 = vmatpush1.msra.mxu0 %v1762
    %1764 = vmatprep.subr.mxu0 0.0
    %v1765 = vand.u32 %v101, 4294901760
    %v1766 = vsub.f32 %v101, %v1765
    %v1767 = vand.u32 %v1766, 4294901760
    %1768 = vmatpush1.msra.mxu0 %v1767
    %1769 = vmatprep.subr.mxu0 0.0
    %v1770 = vand.u32 %v102, 4294901760
    %v1771 = vsub.f32 %v102, %v1770
    %v1772 = vand.u32 %v1771, 4294901760
    %1773 = vmatpush1.msra.mxu0 %v1772
    %1774 = vmatprep.subr.mxu0 0.0
    %v1775 = vand.u32 %v103, 4294901760
    %v1776 = vsub.f32 %v103, %v1775
    %v1777 = vand.u32 %v1776, 4294901760
    %1778 = vmatpush1.msra.mxu0 %v1777
    %1779 = vmatprep.subr.mxu0 0.0
    %v1780 = vand.u32 %v104, 4294901760
    %v1781 = vsub.f32 %v104, %v1780
    %v1782 = vand.u32 %v1781, 4294901760
    %1783 = vmatpush1.msra.mxu0 %v1782
    %1784 = vmatprep.subr.mxu0 0.0
    %v1785 = vand.u32 %v105, 4294901760
    %v1786 = vsub.f32 %v105, %v1785
    %v1787 = vand.u32 %v1786, 4294901760
    %1788 = vmatpush1.msra.mxu0 %v1787
    %1789 = vmatprep.subr.mxu0 0.0
    %v1790 = vand.u32 %v106, 4294901760
    %v1791 = vsub.f32 %v106, %v1790
    %v1792 = vand.u32 %v1791, 4294901760
    %1793 = vmatpush1.msra.mxu0 %v1792
    %1794 = vmatprep.subr.mxu0 0.0
    %v1795 = vand.u32 %v107, 4294901760
    %v1796 = vsub.f32 %v107, %v1795
    %v1797 = vand.u32 %v1796, 4294901760
    %1798 = vmatpush1.msra.mxu0 %v1797
    %1799 = vmatprep.subr.mxu0 0.0
    %v1800 = vand.u32 %v108, 4294901760
    %v1801 = vsub.f32 %v108, %v1800
    %v1802 = vand.u32 %v1801, 4294901760
    %1803 = vmatpush1.msra.mxu0 %v1802
    %1804 = vmatprep.subr.mxu0 0.0
    %v1805 = vand.u32 %v109, 4294901760
    %v1806 = vsub.f32 %v109, %v1805
    %v1807 = vand.u32 %v1806, 4294901760
    %1808 = vmatpush1.msra.mxu0 %v1807
    %1809 = vmatprep.subr.mxu0 0.0
    %v1810 = vand.u32 %v110, 4294901760
    %v1811 = vsub.f32 %v110, %v1810
    %v1812 = vand.u32 %v1811, 4294901760
    %1813 = vmatpush1.msra.mxu0 %v1812
    %1814 = vmatprep.subr.mxu0 0.0
    %v1815 = vand.u32 %v111, 4294901760
    %v1816 = vsub.f32 %v111, %v1815
    %v1817 = vand.u32 %v1816, 4294901760
    %1818 = vmatpush1.msra.mxu0 %v1817
    %1819 = vmatprep.subr.mxu0 0.0
    %v1820 = vand.u32 %v112, 4294901760
    %v1821 = vsub.f32 %v112, %v1820
    %v1822 = vand.u32 %v1821, 4294901760
    %1823 = vmatpush1.msra.mxu0 %v1822
    %1824 = vmatprep.subr.mxu0 0.0
    %v1825 = vand.u32 %v113, 4294901760
    %v1826 = vsub.f32 %v113, %v1825
    %v1827 = vand.u32 %v1826, 4294901760
    %1828 = vmatpush1.msra.mxu0 %v1827
    %1829 = vmatprep.subr.mxu0 0.0
    %v1830 = vand.u32 %v114, 4294901760
    %v1831 = vsub.f32 %v114, %v1830
    %v1832 = vand.u32 %v1831, 4294901760
    %1833 = vmatpush1.msra.mxu0 %v1832
    %v1834 = vand.u32 %v197, 4294901760
    %1835 = vmatprep.mubr.f32.mxu0 %v1834
    %v1836 = vand.u32 %v196, 4294901760
    %1837 = vmatmul.mubr.f32.gmra.mrb[0].mxu0 %v1836
    %v1838 = vpop.f32.mrb[0].mxu0
    %v1839 = vadd.f32 %v1671, %v1838
    %v1840 = vpop.f32.mrb[0].mxu0
    %1841 = vdwg.mxu0
    %1842 = vmatprep.subr.mxu0 0.0
    %v1843 = vand.u32 %v83, 4294901760
    %1844 = vmatpush1.msra.mxu0 %v1843
    %1845 = vmatprep.subr.mxu0 0.0
    %v1846 = vand.u32 %v84, 4294901760
    %1847 = vmatpush1.msra.mxu0 %v1846
    %1848 = vmatprep.subr.mxu0 0.0
    %v1849 = vand.u32 %v85, 4294901760
    %1850 = vmatpush1.msra.mxu0 %v1849
    %1851 = vmatprep.subr.mxu0 0.0
    %v1852 = vand.u32 %v86, 4294901760
    %1853 = vmatpush1.msra.mxu0 %v1852
    %1854 = vmatprep.subr.mxu0 0.0
    %v1855 = vand.u32 %v87, 4294901760
    %1856 = vmatpush1.msra.mxu0 %v1855
    %1857 = vmatprep.subr.mxu0 0.0
    %v1858 = vand.u32 %v88, 4294901760
    %1859 = vmatpush1.msra.mxu0 %v1858
    %1860 = vmatprep.subr.mxu0 0.0
    %v1861 = vand.u32 %v89, 4294901760
    %1862 = vmatpush1.msra.mxu0 %v1861
    %1863 = vmatprep.subr.mxu0 0.0
    %v1864 = vand.u32 %v90, 4294901760
    %1865 = vmatpush1.msra.mxu0 %v1864
    %1866 = vmatprep.subr.mxu0 0.0
    %v1867 = vand.u32 %v91, 4294901760
    %1868 = vmatpush1.msra.mxu0 %v1867
    %1869 = vmatprep.subr.mxu0 0.0
    %v1870 = vand.u32 %v92, 4294901760
    %1871 = vmatpush1.msra.mxu0 %v1870
    %1872 = vmatprep.subr.mxu0 0.0
    %v1873 = vand.u32 %v93, 4294901760
    %1874 = vmatpush1.msra.mxu0 %v1873
    %1875 = vmatprep.subr.mxu0 0.0
    %v1876 = vand.u32 %v94, 4294901760
    %1877 = vmatpush1.msra.mxu0 %v1876
    %1878 = vmatprep.subr.mxu0 0.0
    %v1879 = vand.u32 %v95, 4294901760
    %1880 = vmatpush1.msra.mxu0 %v1879
    %1881 = vmatprep.subr.mxu0 0.0
    %v1882 = vand.u32 %v96, 4294901760
    %1883 = vmatpush1.msra.mxu0 %v1882
    %1884 = vmatprep.subr.mxu0 0.0
    %v1885 = vand.u32 %v97, 4294901760
    %1886 = vmatpush1.msra.mxu0 %v1885
    %1887 = vmatprep.subr.mxu0 0.0
    %v1888 = vand.u32 %v98, 4294901760
    %1889 = vmatpush1.msra.mxu0 %v1888
    %1890 = vmatprep.subr.mxu0 0.0
    %v1891 = vand.u32 %v99, 4294901760
    %1892 = vmatpush1.msra.mxu0 %v1891
    %1893 = vmatprep.subr.mxu0 0.0
    %v1894 = vand.u32 %v100, 4294901760
    %1895 = vmatpush1.msra.mxu0 %v1894
    %1896 = vmatprep.subr.mxu0 0.0
    %v1897 = vand.u32 %v101, 4294901760
    %1898 = vmatpush1.msra.mxu0 %v1897
    %1899 = vmatprep.subr.mxu0 0.0
    %v1900 = vand.u32 %v102, 4294901760
    %1901 = vmatpush1.msra.mxu0 %v1900
    %1902 = vmatprep.subr.mxu0 0.0
    %v1903 = vand.u32 %v103, 4294901760
    %1904 = vmatpush1.msra.mxu0 %v1903
    %1905 = vmatprep.subr.mxu0 0.0
    %v1906 = vand.u32 %v104, 4294901760
    %1907 = vmatpush1.msra.mxu0 %v1906
    %1908 = vmatprep.subr.mxu0 0.0
    %v1909 = vand.u32 %v105, 4294901760
    %1910 = vmatpush1.msra.mxu0 %v1909
    %1911 = vmatprep.subr.mxu0 0.0
    %v1912 = vand.u32 %v106, 4294901760
    %1913 = vmatpush1.msra.mxu0 %v1912
    %1914 = vmatprep.subr.mxu0 0.0
    %v1915 = vand.u32 %v107, 4294901760
    %1916 = vmatpush1.msra.mxu0 %v1915
    %1917 = vmatprep.subr.mxu0 0.0
    %v1918 = vand.u32 %v108, 4294901760
    %1919 = vmatpush1.msra.mxu0 %v1918
    %1920 = vmatprep.subr.mxu0 0.0
    %v1921 = vand.u32 %v109, 4294901760
    %1922 = vmatpush1.msra.mxu0 %v1921
    %1923 = vmatprep.subr.mxu0 0.0
    %v1924 = vand.u32 %v110, 4294901760
    %1925 = vmatpush1.msra.mxu0 %v1924
    %1926 = vmatprep.subr.mxu0 0.0
    %v1927 = vand.u32 %v111, 4294901760
    %1928 = vmatpush1.msra.mxu0 %v1927
    %1929 = vmatprep.subr.mxu0 0.0
    %v1930 = vand.u32 %v112, 4294901760
    %1931 = vmatpush1.msra.mxu0 %v1930
    %1932 = vmatprep.subr.mxu0 0.0
    %v1933 = vand.u32 %v113, 4294901760
    %1934 = vmatpush1.msra.mxu0 %v1933
    %1935 = vmatprep.subr.mxu0 0.0
    %v1936 = vand.u32 %v114, 4294901760
    %1937 = vmatpush1.msra.mxu0 %v1936
    %v1938 = vand.u32 %v197, 4294901760
    %1939 = vmatprep.mubr.f32.mxu0 %v1938
    %v1940 = vand.u32 %v196, 4294901760
    %1941 = vmatmul.mubr.f32.gmra.mrb[0].mxu0 %v1940
    %v1942 = vpop.f32.mrb[0].mxu0
    %v1943 = vadd.f32 %v1839, %v1942
    %v1944 = vpop.f32.mrb[0].mxu0
    %1945 = vdwg.mxu0
    %1946 = vmatprep.subr.mxu0 0.0
    %v1947 = vand.u32 %v115, 4294901760
    %1948 = vmatpush1.msra.mxu0 %v1947
    %1949 = vmatprep.subr.mxu0 0.0
    %v1950 = vand.u32 %v116, 4294901760
    %1951 = vmatpush1.msra.mxu0 %v1950
    %1952 = vmatprep.subr.mxu0 0.0
    %v1953 = vand.u32 %v117, 4294901760
    %1954 = vmatpush1.msra.mxu0 %v1953
    %1955 = vmatprep.subr.mxu0 0.0
    %v1956 = vand.u32 %v118, 4294901760
    %1957 = vmatpush1.msra.mxu0 %v1956
    %1958 = vmatprep.subr.mxu0 0.0
    %v1959 = vand.u32 %v119, 4294901760
    %1960 = vmatpush1.msra.mxu0 %v1959
    %1961 = vmatprep.subr.mxu0 0.0
    %v1962 = vand.u32 %v120, 4294901760
    %1963 = vmatpush1.msra.mxu0 %v1962
    %1964 = vmatprep.subr.mxu0 0.0
    %v1965 = vand.u32 %v121, 4294901760
    %1966 = vmatpush1.msra.mxu0 %v1965
    %1967 = vmatprep.subr.mxu0 0.0
    %v1968 = vand.u32 %v122, 4294901760
    %1969 = vmatpush1.msra.mxu0 %v1968
    %1970 = vmatprep.subr.mxu0 0.0
    %v1971 = vand.u32 %v123, 4294901760
    %1972 = vmatpush1.msra.mxu0 %v1971
    %1973 = vmatprep.subr.mxu0 0.0
    %v1974 = vand.u32 %v124, 4294901760
    %1975 = vmatpush1.msra.mxu0 %v1974
    %1976 = vmatprep.subr.mxu0 0.0
    %v1977 = vand.u32 %v125, 4294901760
    %1978 = vmatpush1.msra.mxu0 %v1977
    %1979 = vmatprep.subr.mxu0 0.0
    %v1980 = vand.u32 %v126, 4294901760
    %1981 = vmatpush1.msra.mxu0 %v1980
    %1982 = vmatprep.subr.mxu0 0.0
    %v1983 = vand.u32 %v127, 4294901760
    %1984 = vmatpush1.msra.mxu0 %v1983
    %1985 = vmatprep.subr.mxu0 0.0
    %v1986 = vand.u32 %v128, 4294901760
    %1987 = vmatpush1.msra.mxu0 %v1986
    %1988 = vmatprep.subr.mxu0 0.0
    %v1989 = vand.u32 %v129, 4294901760
    %1990 = vmatpush1.msra.mxu0 %v1989
    %1991 = vmatprep.subr.mxu0 0.0
    %v1992 = vand.u32 %v130, 4294901760
    %1993 = vmatpush1.msra.mxu0 %v1992
    %1994 = vmatprep.subr.mxu0 0.0
    %v1995 = vand.u32 %v131, 4294901760
    %1996 = vmatpush1.msra.mxu0 %v1995
    %1997 = vmatprep.subr.mxu0 0.0
    %v1998 = vand.u32 %v132, 4294901760
    %1999 = vmatpush1.msra.mxu0 %v1998
    %2000 = vmatprep.subr.mxu0 0.0
    %v2001 = vand.u32 %v133, 4294901760
    %2002 = vmatpush1.msra.mxu0 %v2001
    %2003 = vmatprep.subr.mxu0 0.0
    %v2004 = vand.u32 %v134, 4294901760
    %2005 = vmatpush1.msra.mxu0 %v2004
    %2006 = vmatprep.subr.mxu0 0.0
    %v2007 = vand.u32 %v135, 4294901760
    %2008 = vmatpush1.msra.mxu0 %v2007
    %2009 = vmatprep.subr.mxu0 0.0
    %v2010 = vand.u32 %v136, 4294901760
    %2011 = vmatpush1.msra.mxu0 %v2010
    %2012 = vmatprep.subr.mxu0 0.0
    %v2013 = vand.u32 %v137, 4294901760
    %2014 = vmatpush1.msra.mxu0 %v2013
    %2015 = vmatprep.subr.mxu0 0.0
    %v2016 = vand.u32 %v138, 4294901760
    %2017 = vmatpush1.msra.mxu0 %v2016
    %2018 = vmatprep.subr.mxu0 0.0
    %v2019 = vand.u32 %v139, 4294901760
    %2020 = vmatpush1.msra.mxu0 %v2019
    %2021 = vmatprep.subr.mxu0 0.0
    %v2022 = vand.u32 %v140, 4294901760
    %2023 = vmatpush1.msra.mxu0 %v2022
    %2024 = vmatprep.subr.mxu0 0.0
    %v2025 = vand.u32 %v141, 4294901760
    %2026 = vmatpush1.msra.mxu0 %v2025
    %2027 = vmatprep.subr.mxu0 0.0
    %v2028 = vand.u32 %v142, 4294901760
    %2029 = vmatpush1.msra.mxu0 %v2028
    %2030 = vmatprep.subr.mxu0 0.0
    %v2031 = vand.u32 %v143, 4294901760
    %2032 = vmatpush1.msra.mxu0 %v2031
    %2033 = vmatprep.subr.mxu0 0.0
    %v2034 = vand.u32 %v144, 4294901760
    %2035 = vmatpush1.msra.mxu0 %v2034
    %2036 = vmatprep.subr.mxu0 0.0
    %v2037 = vand.u32 %v145, 4294901760
    %2038 = vmatpush1.msra.mxu0 %v2037
    %2039 = vmatprep.subr.mxu0 0.0
    %v2040 = vand.u32 %v146, 4294901760
    %2041 = vmatpush1.msra.mxu0 %v2040
    %v2042 = vand.u32 %v215, 4294901760
    %v2043 = vsub.f32 %v215, %v2042
    %v2044 = vand.u32 %v2043, 4294901760
    %v2045 = vsub.f32 %v2043, %v2044
    %v2046 = vand.u32 %v2045, 4294901760
    %2047 = vmatprep.mubr.f32.mxu0 %v2046
    %v2048 = vand.u32 %v214, 4294901760
    %v2049 = vsub.f32 %v214, %v2048
    %v2050 = vand.u32 %v2049, 4294901760
    %v2051 = vsub.f32 %v2049, %v2050
    %v2052 = vand.u32 %v2051, 4294901760
    %2053 = vmatmul.mubr.f32.gmra.mrb[0].mxu0 %v2052
    %v2054 = vpop.f32.mrb[0].mxu0
    %v2055 = vadd.f32 %v1943, %v2054
    %v2056 = vpop.f32.mrb[0].mxu0
    %2057 = vdwg.mxu0
    %2058 = vmatprep.subr.mxu0 0.0
    %v2059 = vand.u32 %v115, 4294901760
    %v2060 = vsub.f32 %v115, %v2059
    %v2061 = vand.u32 %v2060, 4294901760
    %v2062 = vsub.f32 %v2060, %v2061
    %v2063 = vand.u32 %v2062, 4294901760
    %2064 = vmatpush1.msra.mxu0 %v2063
    %2065 = vmatprep.subr.mxu0 0.0
    %v2066 = vand.u32 %v116, 4294901760
    %v2067 = vsub.f32 %v116, %v2066
    %v2068 = vand.u32 %v2067, 4294901760
    %v2069 = vsub.f32 %v2067, %v2068
    %v2070 = vand.u32 %v2069, 4294901760
    %2071 = vmatpush1.msra.mxu0 %v2070
    %2072 = vmatprep.subr.mxu0 0.0
    %v2073 = vand.u32 %v117, 4294901760
    %v2074 = vsub.f32 %v117, %v2073
    %v2075 = vand.u32 %v2074, 4294901760
    %v2076 = vsub.f32 %v2074, %v2075
    %v2077 = vand.u32 %v2076, 4294901760
    %2078 = vmatpush1.msra.mxu0 %v2077
    %2079 = vmatprep.subr.mxu0 0.0
    %v2080 = vand.u32 %v118, 4294901760
    %v2081 = vsub.f32 %v118, %v2080
    %v2082 = vand.u32 %v2081, 4294901760
    %v2083 = vsub.f32 %v2081, %v2082
    %v2084 = vand.u32 %v2083, 4294901760
    %2085 = vmatpush1.msra.mxu0 %v2084
    %2086 = vmatprep.subr.mxu0 0.0
    %v2087 = vand.u32 %v119, 4294901760
    %v2088 = vsub.f32 %v119, %v2087
    %v2089 = vand.u32 %v2088, 4294901760
    %v2090 = vsub.f32 %v2088, %v2089
    %v2091 = vand.u32 %v2090, 4294901760
    %2092 = vmatpush1.msra.mxu0 %v2091
    %2093 = vmatprep.subr.mxu0 0.0
    %v2094 = vand.u32 %v120, 4294901760
    %v2095 = vsub.f32 %v120, %v2094
    %v2096 = vand.u32 %v2095, 4294901760
    %v2097 = vsub.f32 %v2095, %v2096
    %v2098 = vand.u32 %v2097, 4294901760
    %2099 = vmatpush1.msra.mxu0 %v2098
    %2100 = vmatprep.subr.mxu0 0.0
    %v2101 = vand.u32 %v121, 4294901760
    %v2102 = vsub.f32 %v121, %v2101
    %v2103 = vand.u32 %v2102, 4294901760
    %v2104 = vsub.f32 %v2102, %v2103
    %v2105 = vand.u32 %v2104, 4294901760
    %2106 = vmatpush1.msra.mxu0 %v2105
    %2107 = vmatprep.subr.mxu0 0.0
    %v2108 = vand.u32 %v122, 4294901760
    %v2109 = vsub.f32 %v122, %v2108
    %v2110 = vand.u32 %v2109, 4294901760
    %v2111 = vsub.f32 %v2109, %v2110
    %v2112 = vand.u32 %v2111, 4294901760
    %2113 = vmatpush1.msra.mxu0 %v2112
    %2114 = vmatprep.subr.mxu0 0.0
    %v2115 = vand.u32 %v123, 4294901760
    %v2116 = vsub.f32 %v123, %v2115
    %v2117 = vand.u32 %v2116, 4294901760
    %v2118 = vsub.f32 %v2116, %v2117
    %v2119 = vand.u32 %v2118, 4294901760
    %2120 = vmatpush1.msra.mxu0 %v2119
    %2121 = vmatprep.subr.mxu0 0.0
    %v2122 = vand.u32 %v124, 4294901760
    %v2123 = vsub.f32 %v124, %v2122
    %v2124 = vand.u32 %v2123, 4294901760
    %v2125 = vsub.f32 %v2123, %v2124
    %v2126 = vand.u32 %v2125, 4294901760
    %2127 = vmatpush1.msra.mxu0 %v2126
    %2128 = vmatprep.subr.mxu0 0.0
    %v2129 = vand.u32 %v125, 4294901760
    %v2130 = vsub.f32 %v125, %v2129
    %v2131 = vand.u32 %v2130, 4294901760
    %v2132 = vsub.f32 %v2130, %v2131
    %v2133 = vand.u32 %v2132, 4294901760
    %2134 = vmatpush1.msra.mxu0 %v2133
    %2135 = vmatprep.subr.mxu0 0.0
    %v2136 = vand.u32 %v126, 4294901760
    %v2137 = vsub.f32 %v126, %v2136
    %v2138 = vand.u32 %v2137, 4294901760
    %v2139 = vsub.f32 %v2137, %v2138
    %v2140 = vand.u32 %v2139, 4294901760
    %2141 = vmatpush1.msra.mxu0 %v2140
    %2142 = vmatprep.subr.mxu0 0.0
    %v2143 = vand.u32 %v127, 4294901760
    %v2144 = vsub.f32 %v127, %v2143
    %v2145 = vand.u32 %v2144, 4294901760
    %v2146 = vsub.f32 %v2144, %v2145
    %v2147 = vand.u32 %v2146, 4294901760
    %2148 = vmatpush1.msra.mxu0 %v2147
    %2149 = vmatprep.subr.mxu0 0.0
    %v2150 = vand.u32 %v128, 4294901760
    %v2151 = vsub.f32 %v128, %v2150
    %v2152 = vand.u32 %v2151, 4294901760
    %v2153 = vsub.f32 %v2151, %v2152
    %v2154 = vand.u32 %v2153, 4294901760
    %2155 = vmatpush1.msra.mxu0 %v2154
    %2156 = vmatprep.subr.mxu0 0.0
    %v2157 = vand.u32 %v129, 4294901760
    %v2158 = vsub.f32 %v129, %v2157
    %v2159 = vand.u32 %v2158, 4294901760
    %v2160 = vsub.f32 %v2158, %v2159
    %v2161 = vand.u32 %v2160, 4294901760
    %2162 = vmatpush1.msra.mxu0 %v2161
    %2163 = vmatprep.subr.mxu0 0.0
    %v2164 = vand.u32 %v130, 4294901760
    %v2165 = vsub.f32 %v130, %v2164
    %v2166 = vand.u32 %v2165, 4294901760
    %v2167 = vsub.f32 %v2165, %v2166
    %v2168 = vand.u32 %v2167, 4294901760
    %2169 = vmatpush1.msra.mxu0 %v2168
    %2170 = vmatprep.subr.mxu0 0.0
    %v2171 = vand.u32 %v131, 4294901760
    %v2172 = vsub.f32 %v131, %v2171
    %v2173 = vand.u32 %v2172, 4294901760
    %v2174 = vsub.f32 %v2172, %v2173
    %v2175 = vand.u32 %v2174, 4294901760
    %2176 = vmatpush1.msra.mxu0 %v2175
    %2177 = vmatprep.subr.mxu0 0.0
    %v2178 = vand.u32 %v132, 4294901760
    %v2179 = vsub.f32 %v132, %v2178
    %v2180 = vand.u32 %v2179, 4294901760
    %v2181 = vsub.f32 %v2179, %v2180
    %v2182 = vand.u32 %v2181, 4294901760
    %2183 = vmatpush1.msra.mxu0 %v2182
    %2184 = vmatprep.subr.mxu0 0.0
    %v2185 = vand.u32 %v133, 4294901760
    %v2186 = vsub.f32 %v133, %v2185
    %v2187 = vand.u32 %v2186, 4294901760
    %v2188 = vsub.f32 %v2186, %v2187
    %v2189 = vand.u32 %v2188, 4294901760
    %2190 = vmatpush1.msra.mxu0 %v2189
    %2191 = vmatprep.subr.mxu0 0.0
    %v2192 = vand.u32 %v134, 4294901760
    %v2193 = vsub.f32 %v134, %v2192
    %v2194 = vand.u32 %v2193, 4294901760
    %v2195 = vsub.f32 %v2193, %v2194
    %v2196 = vand.u32 %v2195, 4294901760
    %2197 = vmatpush1.msra.mxu0 %v2196
    %2198 = vmatprep.subr.mxu0 0.0
    %v2199 = vand.u32 %v135, 4294901760
    %v2200 = vsub.f32 %v135, %v2199
    %v2201 = vand.u32 %v2200, 4294901760
    %v2202 = vsub.f32 %v2200, %v2201
    %v2203 = vand.u32 %v2202, 4294901760
    %2204 = vmatpush1.msra.mxu0 %v2203
    %2205 = vmatprep.subr.mxu0 0.0
    %v2206 = vand.u32 %v136, 4294901760
    %v2207 = vsub.f32 %v136, %v2206
    %v2208 = vand.u32 %v2207, 4294901760
    %v2209 = vsub.f32 %v2207, %v2208
    %v2210 = vand.u32 %v2209, 4294901760
    %2211 = vmatpush1.msra.mxu0 %v2210
    %2212 = vmatprep.subr.mxu0 0.0
    %v2213 = vand.u32 %v137, 4294901760
    %v2214 = vsub.f32 %v137, %v2213
    %v2215 = vand.u32 %v2214, 4294901760
    %v2216 = vsub.f32 %v2214, %v2215
    %v2217 = vand.u32 %v2216, 4294901760
    %2218 = vmatpush1.msra.mxu0 %v2217
    %2219 = vmatprep.subr.mxu0 0.0
    %v2220 = vand.u32 %v138, 4294901760
    %v2221 = vsub.f32 %v138, %v2220
    %v2222 = vand.u32 %v2221, 4294901760
    %v2223 = vsub.f32 %v2221, %v2222
    %v2224 = vand.u32 %v2223, 4294901760
    %2225 = vmatpush1.msra.mxu0 %v2224
    %2226 = vmatprep.subr.mxu0 0.0
    %v2227 = vand.u32 %v139, 4294901760
    %v2228 = vsub.f32 %v139, %v2227
    %v2229 = vand.u32 %v2228, 4294901760
    %v2230 = vsub.f32 %v2228, %v2229
    %v2231 = vand.u32 %v2230, 4294901760
    %2232 = vmatpush1.msra.mxu0 %v2231
    %2233 = vmatprep.subr.mxu0 0.0
    %v2234 = vand.u32 %v140, 4294901760
    %v2235 = vsub.f32 %v140, %v2234
    %v2236 = vand.u32 %v2235, 4294901760
    %v2237 = vsub.f32 %v2235, %v2236
    %v2238 = vand.u32 %v2237, 4294901760
    %2239 = vmatpush1.msra.mxu0 %v2238
    %2240 = vmatprep.subr.mxu0 0.0
    %v2241 = vand.u32 %v141, 4294901760
    %v2242 = vsub.f32 %v141, %v2241
    %v2243 = vand.u32 %v2242, 4294901760
    %v2244 = vsub.f32 %v2242, %v2243
    %v2245 = vand.u32 %v2244, 4294901760
    %2246 = vmatpush1.msra.mxu0 %v2245
    %2247 = vmatprep.subr.mxu0 0.0
    %v2248 = vand.u32 %v142, 4294901760
    %v2249 = vsub.f32 %v142, %v2248
    %v2250 = vand.u32 %v2249, 4294901760
    %v2251 = vsub.f32 %v2249, %v2250
    %v2252 = vand.u32 %v2251, 4294901760
    %2253 = vmatpush1.msra.mxu0 %v2252
    %2254 = vmatprep.subr.mxu0 0.0
    %v2255 = vand.u32 %v143, 4294901760
    %v2256 = vsub.f32 %v143, %v2255
    %v2257 = vand.u32 %v2256, 4294901760
    %v2258 = vsub.f32 %v2256, %v2257
    %v2259 = vand.u32 %v2258, 4294901760
    %2260 = vmatpush1.msra.mxu0 %v2259
    %2261 = vmatprep.subr.mxu0 0.0
    %v2262 = vand.u32 %v144, 4294901760
    %v2263 = vsub.f32 %v144, %v2262
    %v2264 = vand.u32 %v2263, 4294901760
    %v2265 = vsub.f32 %v2263, %v2264
    %v2266 = vand.u32 %v2265, 4294901760
    %2267 = vmatpush1.msra.mxu0 %v2266
    %2268 = vmatprep.subr.mxu0 0.0
    %v2269 = vand.u32 %v145, 4294901760
    %v2270 = vsub.f32 %v145, %v2269
    %v2271 = vand.u32 %v2270, 4294901760
    %v2272 = vsub.f32 %v2270, %v2271
    %v2273 = vand.u32 %v2272, 4294901760
    %2274 = vmatpush1.msra.mxu0 %v2273
    %2275 = vmatprep.subr.mxu0 0.0
    %v2276 = vand.u32 %v146, 4294901760
    %v2277 = vsub.f32 %v146, %v2276
    %v2278 = vand.u32 %v2277, 4294901760
    %v2279 = vsub.f32 %v2277, %v2278
    %v2280 = vand.u32 %v2279, 4294901760
    %2281 = vmatpush1.msra.mxu0 %v2280
    %v2282 = vand.u32 %v215, 4294901760
    %2283 = vmatprep.mubr.f32.mxu0 %v2282
    %v2284 = vand.u32 %v214, 4294901760
    %2285 = vmatmul.mubr.f32.gmra.mrb[0].mxu0 %v2284
    %v2286 = vpop.f32.mrb[0].mxu0
    %v2287 = vadd.f32 %v2055, %v2286
    %v2288 = vpop.f32.mrb[0].mxu0
    %2289 = vdwg.mxu0
    %2290 = vmatprep.subr.mxu0 0.0
    %v2291 = vand.u32 %v115, 4294901760
    %v2292 = vsub.f32 %v115, %v2291
    %2293 = vmatpush1.msra.mxu0 %v2292
    %2294 = vmatprep.subr.mxu0 0.0
    %v2295 = vand.u32 %v116, 4294901760
    %v2296 = vsub.f32 %v116, %v2295
    %2297 = vmatpush1.msra.mxu0 %v2296
    %2298 = vmatprep.subr.mxu0 0.0
    %v2299 = vand.u32 %v117, 4294901760
    %v2300 = vsub.f32 %v117, %v2299
    %2301 = vmatpush1.msra.mxu0 %v2300
    %2302 = vmatprep.subr.mxu0 0.0
    %v2303 = vand.u32 %v118, 4294901760
    %v2304 = vsub.f32 %v118, %v2303
    %2305 = vmatpush1.msra.mxu0 %v2304
    %2306 = vmatprep.subr.mxu0 0.0
    %v2307 = vand.u32 %v119, 4294901760
    %v2308 = vsub.f32 %v119, %v2307
    %2309 = vmatpush1.msra.mxu0 %v2308
    %2310 = vmatprep.subr.mxu0 0.0
    %v2311 = vand.u32 %v120, 4294901760
    %v2312 = vsub.f32 %v120, %v2311
    %2313 = vmatpush1.msra.mxu0 %v2312
    %2314 = vmatprep.subr.mxu0 0.0
    %v2315 = vand.u32 %v121, 4294901760
    %v2316 = vsub.f32 %v121, %v2315
    %2317 = vmatpush1.msra.mxu0 %v2316
    %2318 = vmatprep.subr.mxu0 0.0
    %v2319 = vand.u32 %v122, 4294901760
    %v2320 = vsub.f32 %v122, %v2319
    %2321 = vmatpush1.msra.mxu0 %v2320
    %2322 = vmatprep.subr.mxu0 0.0
    %v2323 = vand.u32 %v123, 4294901760
    %v2324 = vsub.f32 %v123, %v2323
    %2325 = vmatpush1.msra.mxu0 %v2324
    %2326 = vmatprep.subr.mxu0 0.0
    %v2327 = vand.u32 %v124, 4294901760
    %v2328 = vsub.f32 %v124, %v2327
    %2329 = vmatpush1.msra.mxu0 %v2328
    %2330 = vmatprep.subr.mxu0 0.0
    %v2331 = vand.u32 %v125, 4294901760
    %v2332 = vsub.f32 %v125, %v2331
    %2333 = vmatpush1.msra.mxu0 %v2332
    %2334 = vmatprep.subr.mxu0 0.0
    %v2335 = vand.u32 %v126, 4294901760
    %v2336 = vsub.f32 %v126, %v2335
    %2337 = vmatpush1.msra.mxu0 %v2336
    %2338 = vmatprep.subr.mxu0 0.0
    %v2339 = vand.u32 %v127, 4294901760
    %v2340 = vsub.f32 %v127, %v2339
    %2341 = vmatpush1.msra.mxu0 %v2340
    %2342 = vmatprep.subr.mxu0 0.0
    %v2343 = vand.u32 %v128, 4294901760
    %v2344 = vsub.f32 %v128, %v2343
    %2345 = vmatpush1.msra.mxu0 %v2344
    %2346 = vmatprep.subr.mxu0 0.0
    %v2347 = vand.u32 %v129, 4294901760
    %v2348 = vsub.f32 %v129, %v2347
    %2349 = vmatpush1.msra.mxu0 %v2348
    %2350 = vmatprep.subr.mxu0 0.0
    %v2351 = vand.u32 %v130, 4294901760
    %v2352 = vsub.f32 %v130, %v2351
    %2353 = vmatpush1.msra.mxu0 %v2352
    %2354 = vmatprep.subr.mxu0 0.0
    %v2355 = vand.u32 %v131, 4294901760
    %v2356 = vsub.f32 %v131, %v2355
    %2357 = vmatpush1.msra.mxu0 %v2356
    %2358 = vmatprep.subr.mxu0 0.0
    %v2359 = vand.u32 %v132, 4294901760
    %v2360 = vsub.f32 %v132, %v2359
    %2361 = vmatpush1.msra.mxu0 %v2360
    %2362 = vmatprep.subr.mxu0 0.0
    %v2363 = vand.u32 %v133, 4294901760
    %v2364 = vsub.f32 %v133, %v2363
    %2365 = vmatpush1.msra.mxu0 %v2364
    %2366 = vmatprep.subr.mxu0 0.0
    %v2367 = vand.u32 %v134, 4294901760
    %v2368 = vsub.f32 %v134, %v2367
    %2369 = vmatpush1.msra.mxu0 %v2368
    %2370 = vmatprep.subr.mxu0 0.0
    %v2371 = vand.u32 %v135, 4294901760
    %v2372 = vsub.f32 %v135, %v2371
    %2373 = vmatpush1.msra.mxu0 %v2372
    %2374 = vmatprep.subr.mxu0 0.0
    %v2375 = vand.u32 %v136, 4294901760
    %v2376 = vsub.f32 %v136, %v2375
    %2377 = vmatpush1.msra.mxu0 %v2376
    %2378 = vmatprep.subr.mxu0 0.0
    %v2379 = vand.u32 %v137, 4294901760
    %v2380 = vsub.f32 %v137, %v2379
    %2381 = vmatpush1.msra.mxu0 %v2380
    %2382 = vmatprep.subr.mxu0 0.0
    %v2383 = vand.u32 %v138, 4294901760
    %v2384 = vsub.f32 %v138, %v2383
    %2385 = vmatpush1.msra.mxu0 %v2384
    %2386 = vmatprep.subr.mxu0 0.0
    %v2387 = vand.u32 %v139, 4294901760
    %v2388 = vsub.f32 %v139, %v2387
    %2389 = vmatpush1.msra.mxu0 %v2388
    %2390 = vmatprep.subr.mxu0 0.0
    %v2391 = vand.u32 %v140, 4294901760
    %v2392 = vsub.f32 %v140, %v2391
    %2393 = vmatpush1.msra.mxu0 %v2392
    %2394 = vmatprep.subr.mxu0 0.0
    %v2395 = vand.u32 %v141, 4294901760
    %v2396 = vsub.f32 %v141, %v2395
    %2397 = vmatpush1.msra.mxu0 %v2396
    %2398 = vmatprep.subr.mxu0 0.0
    %v2399 = vand.u32 %v142, 4294901760
    %v2400 = vsub.f32 %v142, %v2399
    %2401 = vmatpush1.msra.mxu0 %v2400
    %2402 = vmatprep.subr.mxu0 0.0
    %v2403 = vand.u32 %v143, 4294901760
    %v2404 = vsub.f32 %v143, %v2403
    %2405 = vmatpush1.msra.mxu0 %v2404
    %2406 = vmatprep.subr.mxu0 0.0
    %v2407 = vand.u32 %v144, 4294901760
    %v2408 = vsub.f32 %v144, %v2407
    %2409 = vmatpush1.msra.mxu0 %v2408
    %2410 = vmatprep.subr.mxu0 0.0
    %v2411 = vand.u32 %v145, 4294901760
    %v2412 = vsub.f32 %v145, %v2411
    %2413 = vmatpush1.msra.mxu0 %v2412
    %2414 = vmatprep.subr.mxu0 0.0
    %v2415 = vand.u32 %v146, 4294901760
    %v2416 = vsub.f32 %v146, %v2415
    %2417 = vmatpush1.msra.mxu0 %v2416
    %v2418 = vand.u32 %v215, 4294901760
    %v2419 = vsub.f32 %v215, %v2418
    %2420 = vmatprep.mubr.f32.mxu0 %v2419
    %v2421 = vand.u32 %v214, 4294901760
    %v2422 = vsub.f32 %v214, %v2421
    %2423 = vmatmul.mubr.f32.gmra.mrb[0].mxu0 %v2422
    %v2424 = vpop.f32.mrb[0].mxu0
    %v2425 = vadd.f32 %v2287, %v2424
    %v2426 = vpop.f32.mrb[0].mxu0
    %2427 = vdwg.mxu0
    %2428 = vmatprep.subr.mxu0 0.0
    %v2429 = vand.u32 %v115, 4294901760
    %2430 = vmatpush1.msra.mxu0 %v2429
    %2431 = vmatprep.subr.mxu0 0.0
    %v2432 = vand.u32 %v116, 4294901760
    %2433 = vmatpush1.msra.mxu0 %v2432
    %2434 = vmatprep.subr.mxu0 0.0
    %v2435 = vand.u32 %v117, 4294901760
    %2436 = vmatpush1.msra.mxu0 %v2435
    %2437 = vmatprep.subr.mxu0 0.0
    %v2438 = vand.u32 %v118, 4294901760
    %2439 = vmatpush1.msra.mxu0 %v2438
    %2440 = vmatprep.subr.mxu0 0.0
    %v2441 = vand.u32 %v119, 4294901760
    %2442 = vmatpush1.msra.mxu0 %v2441
    %2443 = vmatprep.subr.mxu0 0.0
    %v2444 = vand.u32 %v120, 4294901760
    %2445 = vmatpush1.msra.mxu0 %v2444
    %2446 = vmatprep.subr.mxu0 0.0
    %v2447 = vand.u32 %v121, 4294901760
    %2448 = vmatpush1.msra.mxu0 %v2447
    %2449 = vmatprep.subr.mxu0 0.0
    %v2450 = vand.u32 %v122, 4294901760
    %2451 = vmatpush1.msra.mxu0 %v2450
    %2452 = vmatprep.subr.mxu0 0.0
    %v2453 = vand.u32 %v123, 4294901760
    %2454 = vmatpush1.msra.mxu0 %v2453
    %2455 = vmatprep.subr.mxu0 0.0
    %v2456 = vand.u32 %v124, 4294901760
    %2457 = vmatpush1.msra.mxu0 %v2456
    %2458 = vmatprep.subr.mxu0 0.0
    %v2459 = vand.u32 %v125, 4294901760
    %2460 = vmatpush1.msra.mxu0 %v2459
    %2461 = vmatprep.subr.mxu0 0.0
    %v2462 = vand.u32 %v126, 4294901760
    %2463 = vmatpush1.msra.mxu0 %v2462
    %2464 = vmatprep.subr.mxu0 0.0
    %v2465 = vand.u32 %v127, 4294901760
    %2466 = vmatpush1.msra.mxu0 %v2465
    %2467 = vmatprep.subr.mxu0 0.0
    %v2468 = vand.u32 %v128, 4294901760
    %2469 = vmatpush1.msra.mxu0 %v2468
    %2470 = vmatprep.subr.mxu0 0.0
    %v2471 = vand.u32 %v129, 4294901760
    %2472 = vmatpush1.msra.mxu0 %v2471
    %2473 = vmatprep.subr.mxu0 0.0
    %v2474 = vand.u32 %v130, 4294901760
    %2475 = vmatpush1.msra.mxu0 %v2474
    %2476 = vmatprep.subr.mxu0 0.0
    %v2477 = vand.u32 %v131, 4294901760
    %2478 = vmatpush1.msra.mxu0 %v2477
    %2479 = vmatprep.subr.mxu0 0.0
    %v2480 = vand.u32 %v132, 4294901760
    %2481 = vmatpush1.msra.mxu0 %v2480
    %2482 = vmatprep.subr.mxu0 0.0
    %v2483 = vand.u32 %v133, 4294901760
    %2484 = vmatpush1.msra.mxu0 %v2483
    %2485 = vmatprep.subr.mxu0 0.0
    %v2486 = vand.u32 %v134, 4294901760
    %2487 = vmatpush1.msra.mxu0 %v2486
    %2488 = vmatprep.subr.mxu0 0.0
    %v2489 = vand.u32 %v135, 4294901760
    %2490 = vmatpush1.msra.mxu0 %v2489
    %2491 = vmatprep.subr.mxu0 0.0
    %v2492 = vand.u32 %v136, 4294901760
    %2493 = vmatpush1.msra.mxu0 %v2492
    %2494 = vmatprep.subr.mxu0 0.0
    %v2495 = vand.u32 %v137, 4294901760
    %2496 = vmatpush1.msra.mxu0 %v2495
    %2497 = vmatprep.subr.mxu0 0.0
    %v2498 = vand.u32 %v138, 4294901760
    %2499 = vmatpush1.msra.mxu0 %v2498
    %2500 = vmatprep.subr.mxu0 0.0
    %v2501 = vand.u32 %v139, 4294901760
    %2502 = vmatpush1.msra.mxu0 %v2501
    %2503 = vmatprep.subr.mxu0 0.0
    %v2504 = vand.u32 %v140, 4294901760
    %2505 = vmatpush1.msra.mxu0 %v2504
    %2506 = vmatprep.subr.mxu0 0.0
    %v2507 = vand.u32 %v141, 4294901760
    %2508 = vmatpush1.msra.mxu0 %v2507
    %2509 = vmatprep.subr.mxu0 0.0
    %v2510 = vand.u32 %v142, 4294901760
    %2511 = vmatpush1.msra.mxu0 %v2510
    %2512 = vmatprep.subr.mxu0 0.0
    %v2513 = vand.u32 %v143, 4294901760
    %2514 = vmatpush1.msra.mxu0 %v2513
    %2515 = vmatprep.subr.mxu0 0.0
    %v2516 = vand.u32 %v144, 4294901760
    %2517 = vmatpush1.msra.mxu0 %v2516
    %2518 = vmatprep.subr.mxu0 0.0
    %v2519 = vand.u32 %v145, 4294901760
    %2520 = vmatpush1.msra.mxu0 %v2519
    %2521 = vmatprep.subr.mxu0 0.0
    %v2522 = vand.u32 %v146, 4294901760
    %2523 = vmatpush1.msra.mxu0 %v2522
    %v2524 = vand.u32 %v215, 4294901760
    %v2525 = vsub.f32 %v215, %v2524
    %v2526 = vand.u32 %v2525, 4294901760
    %2527 = vmatprep.mubr.f32.mxu0 %v2526
    %v2528 = vand.u32 %v214, 4294901760
    %v2529 = vsub.f32 %v214, %v2528
    %v2530 = vand.u32 %v2529, 4294901760
    %2531 = vmatmul.mubr.f32.gmra.mrb[0].mxu0 %v2530
    %v2532 = vpop.f32.mrb[0].mxu0
    %v2533 = vadd.f32 %v2425, %v2532
    %v2534 = vpop.f32.mrb[0].mxu0
    %2535 = vdwg.mxu0
    %2536 = vmatprep.subr.mxu0 0.0
    %v2537 = vand.u32 %v115, 4294901760
    %v2538 = vsub.f32 %v115, %v2537
    %v2539 = vand.u32 %v2538, 4294901760
    %2540 = vmatpush1.msra.mxu0 %v2539
    %2541 = vmatprep.subr.mxu0 0.0
    %v2542 = vand.u32 %v116, 4294901760
    %v2543 = vsub.f32 %v116, %v2542
    %v2544 = vand.u32 %v2543, 4294901760
    %2545 = vmatpush1.msra.mxu0 %v2544
    %2546 = vmatprep.subr.mxu0 0.0
    %v2547 = vand.u32 %v117, 4294901760
    %v2548 = vsub.f32 %v117, %v2547
    %v2549 = vand.u32 %v2548, 4294901760
    %2550 = vmatpush1.msra.mxu0 %v2549
    %2551 = vmatprep.subr.mxu0 0.0
    %v2552 = vand.u32 %v118, 4294901760
    %v2553 = vsub.f32 %v118, %v2552
    %v2554 = vand.u32 %v2553, 4294901760
    %2555 = vmatpush1.msra.mxu0 %v2554
    %2556 = vmatprep.subr.mxu0 0.0
    %v2557 = vand.u32 %v119, 4294901760
    %v2558 = vsub.f32 %v119, %v2557
    %v2559 = vand.u32 %v2558, 4294901760
    %2560 = vmatpush1.msra.mxu0 %v2559
    %2561 = vmatprep.subr.mxu0 0.0
    %v2562 = vand.u32 %v120, 4294901760
    %v2563 = vsub.f32 %v120, %v2562
    %v2564 = vand.u32 %v2563, 4294901760
    %2565 = vmatpush1.msra.mxu0 %v2564
    %2566 = vmatprep.subr.mxu0 0.0
    %v2567 = vand.u32 %v121, 4294901760
    %v2568 = vsub.f32 %v121, %v2567
    %v2569 = vand.u32 %v2568, 4294901760
    %2570 = vmatpush1.msra.mxu0 %v2569
    %2571 = vmatprep.subr.mxu0 0.0
    %v2572 = vand.u32 %v122, 4294901760
    %v2573 = vsub.f32 %v122, %v2572
    %v2574 = vand.u32 %v2573, 4294901760
    %2575 = vmatpush1.msra.mxu0 %v2574
    %2576 = vmatprep.subr.mxu0 0.0
    %v2577 = vand.u32 %v123, 4294901760
    %v2578 = vsub.f32 %v123, %v2577
    %v2579 = vand.u32 %v2578, 4294901760
    %2580 = vmatpush1.msra.mxu0 %v2579
    %2581 = vmatprep.subr.mxu0 0.0
    %v2582 = vand.u32 %v124, 4294901760
    %v2583 = vsub.f32 %v124, %v2582
    %v2584 = vand.u32 %v2583, 4294901760
    %2585 = vmatpush1.msra.mxu0 %v2584
    %2586 = vmatprep.subr.mxu0 0.0
    %v2587 = vand.u32 %v125, 4294901760
    %v2588 = vsub.f32 %v125, %v2587
    %v2589 = vand.u32 %v2588, 4294901760
    %2590 = vmatpush1.msra.mxu0 %v2589
    %2591 = vmatprep.subr.mxu0 0.0
    %v2592 = vand.u32 %v126, 4294901760
    %v2593 = vsub.f32 %v126, %v2592
    %v2594 = vand.u32 %v2593, 4294901760
    %2595 = vmatpush1.msra.mxu0 %v2594
    %2596 = vmatprep.subr.mxu0 0.0
    %v2597 = vand.u32 %v127, 4294901760
    %v2598 = vsub.f32 %v127, %v2597
    %v2599 = vand.u32 %v2598, 4294901760
    %2600 = vmatpush1.msra.mxu0 %v2599
    %2601 = vmatprep.subr.mxu0 0.0
    %v2602 = vand.u32 %v128, 4294901760
    %v2603 = vsub.f32 %v128, %v2602
    %v2604 = vand.u32 %v2603, 4294901760
    %2605 = vmatpush1.msra.mxu0 %v2604
    %2606 = vmatprep.subr.mxu0 0.0
    %v2607 = vand.u32 %v129, 4294901760
    %v2608 = vsub.f32 %v129, %v2607
    %v2609 = vand.u32 %v2608, 4294901760
    %2610 = vmatpush1.msra.mxu0 %v2609
    %2611 = vmatprep.subr.mxu0 0.0
    %v2612 = vand.u32 %v130, 4294901760
    %v2613 = vsub.f32 %v130, %v2612
    %v2614 = vand.u32 %v2613, 4294901760
    %2615 = vmatpush1.msra.mxu0 %v2614
    %2616 = vmatprep.subr.mxu0 0.0
    %v2617 = vand.u32 %v131, 4294901760
    %v2618 = vsub.f32 %v131, %v2617
    %v2619 = vand.u32 %v2618, 4294901760
    %2620 = vmatpush1.msra.mxu0 %v2619
    %2621 = vmatprep.subr.mxu0 0.0
    %v2622 = vand.u32 %v132, 4294901760
    %v2623 = vsub.f32 %v132, %v2622
    %v2624 = vand.u32 %v2623, 4294901760
    %2625 = vmatpush1.msra.mxu0 %v2624
    %2626 = vmatprep.subr.mxu0 0.0
    %v2627 = vand.u32 %v133, 4294901760
    %v2628 = vsub.f32 %v133, %v2627
    %v2629 = vand.u32 %v2628, 4294901760
    %2630 = vmatpush1.msra.mxu0 %v2629
    %2631 = vmatprep.subr.mxu0 0.0
    %v2632 = vand.u32 %v134, 4294901760
    %v2633 = vsub.f32 %v134, %v2632
    %v2634 = vand.u32 %v2633, 4294901760
    %2635 = vmatpush1.msra.mxu0 %v2634
    %2636 = vmatprep.subr.mxu0 0.0
    %v2637 = vand.u32 %v135, 4294901760
    %v2638 = vsub.f32 %v135, %v2637
    %v2639 = vand.u32 %v2638, 4294901760
    %2640 = vmatpush1.msra.mxu0 %v2639
    %2641 = vmatprep.subr.mxu0 0.0
    %v2642 = vand.u32 %v136, 4294901760
    %v2643 = vsub.f32 %v136, %v2642
    %v2644 = vand.u32 %v2643, 4294901760
    %2645 = vmatpush1.msra.mxu0 %v2644
    %2646 = vmatprep.subr.mxu0 0.0
    %v2647 = vand.u32 %v137, 4294901760
    %v2648 = vsub.f32 %v137, %v2647
    %v2649 = vand.u32 %v2648, 4294901760
    %2650 = vmatpush1.msra.mxu0 %v2649
    %2651 = vmatprep.subr.mxu0 0.0
    %v2652 = vand.u32 %v138, 4294901760
    %v2653 = vsub.f32 %v138, %v2652
    %v2654 = vand.u32 %v2653, 4294901760
    %2655 = vmatpush1.msra.mxu0 %v2654
    %2656 = vmatprep.subr.mxu0 0.0
    %v2657 = vand.u32 %v139, 4294901760
    %v2658 = vsub.f32 %v139, %v2657
    %v2659 = vand.u32 %v2658, 4294901760
    %2660 = vmatpush1.msra.mxu0 %v2659
    %2661 = vmatprep.subr.mxu0 0.0
    %v2662 = vand.u32 %v140, 4294901760
    %v2663 = vsub.f32 %v140, %v2662
    %v2664 = vand.u32 %v2663, 4294901760
    %2665 = vmatpush1.msra.mxu0 %v2664
    %2666 = vmatprep.subr.mxu0 0.0
    %v2667 = vand.u32 %v141, 4294901760
    %v2668 = vsub.f32 %v141, %v2667
    %v2669 = vand.u32 %v2668, 4294901760
    %2670 = vmatpush1.msra.mxu0 %v2669
    %2671 = vmatprep.subr.mxu0 0.0
    %v2672 = vand.u32 %v142, 4294901760
    %v2673 = vsub.f32 %v142, %v2672
    %v2674 = vand.u32 %v2673, 4294901760
    %2675 = vmatpush1.msra.mxu0 %v2674
    %2676 = vmatprep.subr.mxu0 0.0
    %v2677 = vand.u32 %v143, 4294901760
    %v2678 = vsub.f32 %v143, %v2677
    %v2679 = vand.u32 %v2678, 4294901760
    %2680 = vmatpush1.msra.mxu0 %v2679
    %2681 = vmatprep.subr.mxu0 0.0
    %v2682 = vand.u32 %v144, 4294901760
    %v2683 = vsub.f32 %v144, %v2682
    %v2684 = vand.u32 %v2683, 4294901760
    %2685 = vmatpush1.msra.mxu0 %v2684
    %2686 = vmatprep.subr.mxu0 0.0
    %v2687 = vand.u32 %v145, 4294901760
    %v2688 = vsub.f32 %v145, %v2687
    %v2689 = vand.u32 %v2688, 4294901760
    %2690 = vmatpush1.msra.mxu0 %v2689
    %2691 = vmatprep.subr.mxu0 0.0
    %v2692 = vand.u32 %v146, 4294901760
    %v2693 = vsub.f32 %v146, %v2692
    %v2694 = vand.u32 %v2693, 4294901760
    %2695 = vmatpush1.msra.mxu0 %v2694
    %v2696 = vand.u32 %v215, 4294901760
    %2697 = vmatprep.mubr.f32.mxu0 %v2696
    %v2698 = vand.u32 %v214, 4294901760
    %2699 = vmatmul.mubr.f32.gmra.mrb[0].mxu0 %v2698
    %v2700 = vpop.f32.mrb[0].mxu0
    %v2701 = vadd.f32 %v2533, %v2700
    %v2702 = vpop.f32.mrb[0].mxu0
    %2703 = vdwg.mxu0
    %2704 = vmatprep.subr.mxu0 0.0
    %v2705 = vand.u32 %v115, 4294901760
    %2706 = vmatpush1.msra.mxu0 %v2705
    %2707 = vmatprep.subr.mxu0 0.0
    %v2708 = vand.u32 %v116, 4294901760
    %2709 = vmatpush1.msra.mxu0 %v2708
    %2710 = vmatprep.subr.mxu0 0.0
    %v2711 = vand.u32 %v117, 4294901760
    %2712 = vmatpush1.msra.mxu0 %v2711
    %2713 = vmatprep.subr.mxu0 0.0
    %v2714 = vand.u32 %v118, 4294901760
    %2715 = vmatpush1.msra.mxu0 %v2714
    %2716 = vmatprep.subr.mxu0 0.0
    %v2717 = vand.u32 %v119, 4294901760
    %2718 = vmatpush1.msra.mxu0 %v2717
    %2719 = vmatprep.subr.mxu0 0.0
    %v2720 = vand.u32 %v120, 4294901760
    %2721 = vmatpush1.msra.mxu0 %v2720
    %2722 = vmatprep.subr.mxu0 0.0
    %v2723 = vand.u32 %v121, 4294901760
    %2724 = vmatpush1.msra.mxu0 %v2723
    %2725 = vmatprep.subr.mxu0 0.0
    %v2726 = vand.u32 %v122, 4294901760
    %2727 = vmatpush1.msra.mxu0 %v2726
    %2728 = vmatprep.subr.mxu0 0.0
    %v2729 = vand.u32 %v123, 4294901760
    %2730 = vmatpush1.msra.mxu0 %v2729
    %2731 = vmatprep.subr.mxu0 0.0
    %v2732 = vand.u32 %v124, 4294901760
    %2733 = vmatpush1.msra.mxu0 %v2732
    %2734 = vmatprep.subr.mxu0 0.0
    %v2735 = vand.u32 %v125, 4294901760
    %2736 = vmatpush1.msra.mxu0 %v2735
    %2737 = vmatprep.subr.mxu0 0.0
    %v2738 = vand.u32 %v126, 4294901760
    %2739 = vmatpush1.msra.mxu0 %v2738
    %2740 = vmatprep.subr.mxu0 0.0
    %v2741 = vand.u32 %v127, 4294901760
    %2742 = vmatpush1.msra.mxu0 %v2741
    %2743 = vmatprep.subr.mxu0 0.0
    %v2744 = vand.u32 %v128, 4294901760
    %2745 = vmatpush1.msra.mxu0 %v2744
    %2746 = vmatprep.subr.mxu0 0.0
    %v2747 = vand.u32 %v129, 4294901760
    %2748 = vmatpush1.msra.mxu0 %v2747
    %2749 = vmatprep.subr.mxu0 0.0
    %v2750 = vand.u32 %v130, 4294901760
    %2751 = vmatpush1.msra.mxu0 %v2750
    %2752 = vmatprep.subr.mxu0 0.0
    %v2753 = vand.u32 %v131, 4294901760
    %2754 = vmatpush1.msra.mxu0 %v2753
    %2755 = vmatprep.subr.mxu0 0.0
    %v2756 = vand.u32 %v132, 4294901760
    %2757 = vmatpush1.msra.mxu0 %v2756
    %2758 = vmatprep.subr.mxu0 0.0
    %v2759 = vand.u32 %v133, 4294901760
    %2760 = vmatpush1.msra.mxu0 %v2759
    %2761 = vmatprep.subr.mxu0 0.0
    %v2762 = vand.u32 %v134, 4294901760
    %2763 = vmatpush1.msra.mxu0 %v2762
    %2764 = vmatprep.subr.mxu0 0.0
    %v2765 = vand.u32 %v135, 4294901760
    %2766 = vmatpush1.msra.mxu0 %v2765
    %2767 = vmatprep.subr.mxu0 0.0
    %v2768 = vand.u32 %v136, 4294901760
    %2769 = vmatpush1.msra.mxu0 %v2768
    %2770 = vmatprep.subr.mxu0 0.0
    %v2771 = vand.u32 %v137, 4294901760
    %2772 = vmatpush1.msra.mxu0 %v2771
    %2773 = vmatprep.subr.mxu0 0.0
    %v2774 = vand.u32 %v138, 4294901760
    %2775 = vmatpush1.msra.mxu0 %v2774
    %2776 = vmatprep.subr.mxu0 0.0
    %v2777 = vand.u32 %v139, 4294901760
    %2778 = vmatpush1.msra.mxu0 %v2777
    %2779 = vmatprep.subr.mxu0 0.0
    %v2780 = vand.u32 %v140, 4294901760
    %2781 = vmatpush1.msra.mxu0 %v2780
    %2782 = vmatprep.subr.mxu0 0.0
    %v2783 = vand.u32 %v141, 4294901760
    %2784 = vmatpush1.msra.mxu0 %v2783
    %2785 = vmatprep.subr.mxu0 0.0
    %v2786 = vand.u32 %v142, 4294901760
    %2787 = vmatpush1.msra.mxu0 %v2786
    %2788 = vmatprep.subr.mxu0 0.0
    %v2789 = vand.u32 %v143, 4294901760
    %2790 = vmatpush1.msra.mxu0 %v2789
    %2791 = vmatprep.subr.mxu0 0.0
    %v2792 = vand.u32 %v144, 4294901760
    %2793 = vmatpush1.msra.mxu0 %v2792
    %2794 = vmatprep.subr.mxu0 0.0
    %v2795 = vand.u32 %v145, 4294901760
    %2796 = vmatpush1.msra.mxu0 %v2795
    %2797 = vmatprep.subr.mxu0 0.0
    %v2798 = vand.u32 %v146, 4294901760
    %2799 = vmatpush1.msra.mxu0 %v2798
    %v2800 = vand.u32 %v215, 4294901760
    %2801 = vmatprep.mubr.f32.mxu0 %v2800
    %v2802 = vand.u32 %v214, 4294901760
    %2803 = vmatmul.mubr.f32.gmra.mrb[0].mxu0 %v2802
    %v2804 = vpop.f32.mrb[0].mxu0
    %v2805 = vadd.f32 %v2701, %v2804
    %v2806 = vpop.f32.mrb[0].mxu0
    %2807 = vdwg.mxu0
    %v2808 = vmax.f32 %v2805, 0.0
    %v2809 = vlaneseq
    %v2810 = vand.u32 %v2809, 127
    %vm2811 = vcmp.lt.s32.totalorder %v2810, 20
    %v2812 = vsel %vm2811, %v2808, -inf
    %2813 = vmax.xlane.f32.xlu0 %v2812
    %v2814 = vpop.xlane.xlu0 %2813
    %v2815 = vsub.f32 %v2812, %v2814
    %v2816 = vmul.f32 %v2815, 1.442695
    %v2817 = vpow.pop %v2816
    %2818 = vadd.xlane.f32.xlu0 %v2817
    %v2819 = vpop.xlane.xlu0 %2818
    %v2820 = vrcp.pop %v2819
    %v2821 = vmul.f32 %v2817, %v2820
    %2822 = vst [vmem:[#allocation7] sm:$0xff] %v2821
    // Predicated region
    $region22: #{_fc_relu_softmax.1} parent=1 // pred_check
      _
    $region23: #{_fc_relu_softmax.1} parent=1 // pred_check_branch
      %2824 = sbr.rel (0) target = $region25
    $region24: #{_fc_relu_softmax.1} parent=1 // pred_region
      %s2826 = ssub.s32 128, 32
      %2827 = vsyncadd [#allocation4], %s2826
      %s2828 = sshll.u32 [#allocation7], 4
      %s2829 = int_to_ptr.vmem [resolvable:$true] %s2828
      %2834 = dma.vmem_to_hbm [thread:$0]  %s2829, 32, %s3, [#allocation4], 32, 32, 2
    $region25: #{_fc_relu_softmax.1} parent=1 // pred_fallthru
      _
    // Predicated region
    $region26: #{_fc_relu_softmax.1} parent=1 // pred_check
      _
    $region27: #{_fc_relu_softmax.1} parent=1 // pred_check_branch
      %2836 = sbr.rel (0) target = $region29
    $region28: #{_fc_relu_softmax.1} parent=1 // pred_region
      %2837 = dma.done [#allocation4], 128
    $region29: #{_fc_relu_softmax.1} parent=1 // pred_fallthru
      _
    %2838 = vsyncpa [#allocation3], 1
    %2839 = vsyncpa [#allocation6], 1
    %2840 = vsyncpa [#allocation4], 1

</llo_original>
